<compile_context>
chip_gen: v5e
topology: v5e:2x2
jax: 0.10.0
libtpu: 0.0.40
codegen_flags: <defaults>
</compile_context>

<pallas_src>
import jax
import jax.numpy as jnp
from jax.experimental import pallas as pl
from jax.experimental.pallas import tpu as pltpu


PAD_OFF = 8  # f32 sublane tile: keeps the padded-interior store vreg-aligned along W.


def fused_resblock_kernel(x_ref, w1_ref, w2_ref, s1_ref, b1_ref, s2_ref, b2_ref,
                          o_ref, pad_ref):
    """Fused ResBlock forward.

    x_ref            : (N, H, W, C) f32 NHWC input (also the residual)
    w1_ref, w2_ref   : (3, 3*C, C)  bf16 per-dy im2col conv weights (HWIO flattened)
    s*_ref, b*_ref   : (1, C)       f32 folded BatchNorm scale / bias (incl. conv bias)
    o_ref            : (N*H*W, C)   f32 output (lane-dense: C == 128)
    pad_ref          : (N, H+2, PAD_OFF+W+1, C) f32 VMEM scratch holding the
                       zero-padded conv input (reused for x, then for h1).
    """
    N, H, W, C = x_ref.shape
    M = N * H * W

    def conv3x3(w_ref):
        # Per-dy im2col: lane-aligned concat of the 3 dx-shifted windows -> (M, 3C)
        # bf16 patch -> one deep-K MXU matmul per dy, f32 accumulation.
        acc = None
        for dy in range(3):
            taps = [pad_ref[:, dy:dy + H, PAD_OFF - 1 + dx:PAD_OFF - 1 + dx + W, :]
                    for dx in range(3)]
            patch = jnp.concatenate(taps, axis=-1).reshape(M, 3 * C)
            part = jnp.dot(patch.astype(jnp.bfloat16), w_ref[dy],
                           preferred_element_type=jnp.float32)
            acc = part if acc is None else acc + part
        return acc

    # In-kernel zero padding (no wrapper-side jnp.pad / zeros ops).
    pad_ref[...] = jnp.zeros_like(pad_ref)
    pad_ref[:, 1:H + 1, PAD_OFF:PAD_OFF + W, :] = x_ref[...]

    # Stage 1: relu(bn1(conv1(x)))  -- BN folded to per-channel scale/bias, f32 epilogue.
    h1 = jnp.maximum(conv3x3(w1_ref) * s1_ref[...] + b1_ref[...], 0.0)

    # Reuse the padded scratch for h1 (border columns/rows remain zero).
    pad_ref[:, 1:H + 1, PAD_OFF:PAD_OFF + W, :] = h1.reshape(N, H, W, C)

    # Stage 2: relu(bn2(conv2(h1)) + x)  -- residual add stays f32.
    y = conv3x3(w2_ref) * s2_ref[...] + b2_ref[...] + x_ref[...].reshape(M, C)
    o_ref[...] = jnp.maximum(y, 0.0)


@jax.jit
def resblock_forward(x_nchw, params):
    """ResBlock forward. x_nchw: (N, C, H, W) f32. Returns (N, C, H, W) f32."""
    w1r, w2r, s1, b1, s2, b2 = params
    x = jnp.transpose(x_nchw, (0, 2, 3, 1)).astype(jnp.float32)   # NHWC (C = lanes)
    N, H, W, C = x.shape

    out_flat = pl.pallas_call(
        fused_resblock_kernel,
        out_shape=jax.ShapeDtypeStruct((N * H * W, C), jnp.float32),
        in_specs=[pl.BlockSpec(memory_space=pltpu.MemorySpace.VMEM)] * 7,
        out_specs=pl.BlockSpec(memory_space=pltpu.MemorySpace.VMEM),
        scratch_shapes=[pltpu.VMEM((N, H + 2, PAD_OFF + W + 1, C), jnp.float32)],
    )(x, w1r, w2r, s1, b1, s2, b2)

    return jnp.transpose(out_flat.reshape(N, H, W, C), (0, 3, 1, 2))   # back to NCHW


if __name__ == "__main__":
    N, C, H, W = 2, 128, 8, 8          # batch=2, num_hidden=128 (AlphaZero-style), 8x8 board
    eps = 1e-5

    key = jax.random.PRNGKey(0)
    k = jax.random.split(key, 13)

    # Conv / BN parameters (deterministic synthetic init), PyTorch conventions (OIHW).
    conv1_w = jax.random.normal(k[0], (C, C, 3, 3), jnp.float32) * 0.05
    conv1_b = jax.random.normal(k[1], (C,), jnp.float32) * 0.05
    g1 = 1.0 + 0.1 * jax.random.normal(k[2], (C,), jnp.float32)
    be1 = 0.1 * jax.random.normal(k[3], (C,), jnp.float32)
    m1 = 0.1 * jax.random.normal(k[4], (C,), jnp.float32)
    v1 = jax.random.uniform(k[5], (C,), jnp.float32, minval=0.5, maxval=1.5)

    conv2_w = jax.random.normal(k[6], (C, C, 3, 3), jnp.float32) * 0.05
    conv2_b = jax.random.normal(k[7], (C,), jnp.float32) * 0.05
    g2 = 1.0 + 0.1 * jax.random.normal(k[8], (C,), jnp.float32)
    be2 = 0.1 * jax.random.normal(k[9], (C,), jnp.float32)
    m2 = 0.1 * jax.random.normal(k[10], (C,), jnp.float32)
    v2 = jax.random.uniform(k[11], (C,), jnp.float32, minval=0.5, maxval=1.5)

    x = jax.random.normal(k[12], (N, C, H, W), jnp.float32)

    # Fold BN (inference) + conv bias into per-channel scale/bias for the kernel.
    def fold(g, be, m, v, cb):
        scale = g / jnp.sqrt(v + eps)
        bias = be + scale * (cb - m)
        return scale.reshape(1, C), bias.reshape(1, C)

    s1, b1 = fold(g1, be1, m1, v1, conv1_b)
    s2, b2 = fold(g2, be2, m2, v2, conv2_b)

    # OIHW -> HWIO -> per-dy flattened (3, 3*C, C), bf16 MXU operands.
    w1r = jnp.transpose(conv1_w, (2, 3, 1, 0)).reshape(3, 3 * C, C).astype(jnp.bfloat16)
    w2r = jnp.transpose(conv2_w, (2, 3, 1, 0)).reshape(3, 3 * C, C).astype(jnp.bfloat16)

    params = (w1r, w2r, s1, b1, s2, b2)
    out = jax.block_until_ready(resblock_forward(x, params))

    # Pure-JAX f32 reference (same math, NCHW) for verification.
    def ref_forward(xi):
        def conv(z, w, b):
            y = jax.lax.conv_general_dilated(
                z, w, (1, 1), "SAME",
                dimension_numbers=("NCHW", "OIHW", "NCHW"))
            return y + b[None, :, None, None]

        def bn(z, g, be, m, v):
            sc = (g / jnp.sqrt(v + eps))[None, :, None, None]
            return (z - m[None, :, None, None]) * sc + be[None, :, None, None]

        y = jax.nn.relu(bn(conv(xi, conv1_w, conv1_b), g1, be1, m1, v1))
        y = bn(conv(y, conv2_w, conv2_b), g2, be2, m2, v2)
        return jax.nn.relu(y + xi)

    ref = jax.block_until_ready(ref_forward(x))
    assert out.shape == (N, C, H, W)
    # Tolerance reflects bf16 MXU operands (accumulation and epilogue are f32).
    assert jnp.allclose(out, ref, atol=5e-2, rtol=2e-2), \
        f"max abs err = {jnp.max(jnp.abs(out - ref))}"

    print("KERNEL_OK")
</pallas_src>

<mosaic_0001>
module attributes {stable_mosaic.version = 11 : i64} {
  func.func @fused_resblock_kernel(%arg0: memref<2x8x8x128xf32, #tpu.memory_space<vmem>>, %arg1: memref<3x384x128xbf16, #tpu.memory_space<vmem>>, %arg2: memref<3x384x128xbf16, #tpu.memory_space<vmem>>, %arg3: memref<1x128xf32, #tpu.memory_space<vmem>>, %arg4: memref<1x128xf32, #tpu.memory_space<vmem>>, %arg5: memref<1x128xf32, #tpu.memory_space<vmem>>, %arg6: memref<1x128xf32, #tpu.memory_space<vmem>>, %arg7: memref<128x128xf32, #tpu.memory_space<vmem>>, %arg8: memref<2x10x17x128xf32, #tpu.memory_space<vmem>>) attributes {dimension_semantics = [], scalar_prefetch = 0 : i64, scratch_operands = 1 : i64, tpu.core_type = #tpu.core_type<tc>} {
    %cst = arith.constant 0.000000e+00 : f32
    %0 = vector.broadcast %cst : f32 to vector<2x10x17x128xf32>
    %c0 = arith.constant 0 : index
    %c0_0 = arith.constant 0 : index
    %c0_1 = arith.constant 0 : index
    %c0_2 = arith.constant 0 : index
    %1 = vector.load %arg8[%c0, %c0_0, %c0_1, %c0_2] : memref<2x10x17x128xf32, #tpu.memory_space<vmem>>, vector<2x10x17x128xf32>
    tpu.vector_store %arg8[%c0, %c0_0, %c0_1, %c0_2], %0 {strides = array<i32>} : memref<2x10x17x128xf32, #tpu.memory_space<vmem>>, vector<2x10x17x128xf32>,
    %c0_3 = arith.constant 0 : index
    %c0_4 = arith.constant 0 : index
    %c0_5 = arith.constant 0 : index
    %c0_6 = arith.constant 0 : index
    %2 = vector.load %arg0[%c0_3, %c0_4, %c0_5, %c0_6] : memref<2x8x8x128xf32, #tpu.memory_space<vmem>>, vector<2x8x8x128xf32>
    %c0_7 = arith.constant 0 : index
    %c1 = arith.constant 1 : index
    %c8 = arith.constant 8 : index
    %c0_8 = arith.constant 0 : index
    %3 = vector.load %arg8[%c0_7, %c1, %c8, %c0_8] : memref<2x10x17x128xf32, #tpu.memory_space<vmem>>, vector<2x8x8x128xf32>
    tpu.vector_store %arg8[%c0_7, %c1, %c8, %c0_8], %2 {strides = array<i32>} : memref<2x10x17x128xf32, #tpu.memory_space<vmem>>, vector<2x8x8x128xf32>,
    %c0_9 = arith.constant 0 : index
    %c0_10 = arith.constant 0 : index
    %c7 = arith.constant 7 : index
    %c0_11 = arith.constant 0 : index
    %4 = vector.load %arg8[%c0_9, %c0_10, %c7, %c0_11] : memref<2x10x17x128xf32, #tpu.memory_space<vmem>>, vector<2x8x8x128xf32>
    %c0_12 = arith.constant 0 : index
    %c0_13 = arith.constant 0 : index
    %c8_14 = arith.constant 8 : index
    %c0_15 = arith.constant 0 : index
    %5 = vector.load %arg8[%c0_12, %c0_13, %c8_14, %c0_15] : memref<2x10x17x128xf32, #tpu.memory_space<vmem>>, vector<2x8x8x128xf32>
    %c0_16 = arith.constant 0 : index
    %c0_17 = arith.constant 0 : index
    %c9 = arith.constant 9 : index
    %c0_18 = arith.constant 0 : index
    %6 = vector.load %arg8[%c0_16, %c0_17, %c9, %c0_18] : memref<2x10x17x128xf32, #tpu.memory_space<vmem>>, vector<2x8x8x128xf32>
    %7 = tpu.concatenate %4, %5, %6 in 3 : vector<2x8x8x128xf32>, vector<2x8x8x128xf32>, vector<2x8x8x128xf32> -> vector<2x8x8x384xf32>
    %8 = vector.shape_cast %7 : vector<2x8x8x384xf32> to vector<128x384xf32>
    %9 = arith.truncf %8 : vector<128x384xf32> to vector<128x384xbf16>
    %c0_19 = arith.constant 0 : index
    %c0_20 = arith.constant 0 : index
    %c0_21 = arith.constant 0 : index
    %10 = vector.load %arg1[%c0_19, %c0_20, %c0_21] : memref<3x384x128xbf16, #tpu.memory_space<vmem>>, vector<1x384x128xbf16>
    %11 = vector.shape_cast %10 : vector<1x384x128xbf16> to vector<384x128xbf16>
    %cst_22 = arith.constant dense<0.000000e+00> : vector<128x128xf32>
    %12 = tpu.matmul %9, %11, %cst_22 {dimension_numbers = #tpu.dot_dimension_numbers<[1], [0], [0], [1], [0, 0, 1, 1], [], []>} : vector<128x384xbf16>, vector<384x128xbf16>, vector<128x128xf32> -> vector<128x128xf32>
    %c0_23 = arith.constant 0 : index
    %c1_24 = arith.constant 1 : index
    %c7_25 = arith.constant 7 : index
    %c0_26 = arith.constant 0 : index
    %13 = vector.load %arg8[%c0_23, %c1_24, %c7_25, %c0_26] : memref<2x10x17x128xf32, #tpu.memory_space<vmem>>, vector<2x8x8x128xf32>
    %c0_27 = arith.constant 0 : index
    %c1_28 = arith.constant 1 : index
    %c8_29 = arith.constant 8 : index
    %c0_30 = arith.constant 0 : index
    %14 = vector.load %arg8[%c0_27, %c1_28, %c8_29, %c0_30] : memref<2x10x17x128xf32, #tpu.memory_space<vmem>>, vector<2x8x8x128xf32>
    %c0_31 = arith.constant 0 : index
    %c1_32 = arith.constant 1 : index
    %c9_33 = arith.constant 9 : index
    %c0_34 = arith.constant 0 : index
    %15 = vector.load %arg8[%c0_31, %c1_32, %c9_33, %c0_34] : memref<2x10x17x128xf32, #tpu.memory_space<vmem>>, vector<2x8x8x128xf32>
    %16 = tpu.concatenate %13, %14, %15 in 3 : vector<2x8x8x128xf32>, vector<2x8x8x128xf32>, vector<2x8x8x128xf32> -> vector<2x8x8x384xf32>
    %17 = vector.shape_cast %16 : vector<2x8x8x384xf32> to vector<128x384xf32>
    %18 = arith.truncf %17 : vector<128x384xf32> to vector<128x384xbf16>
    %c1_35 = arith.constant 1 : index
    %c0_36 = arith.constant 0 : index
    %c0_37 = arith.constant 0 : index
    %19 = vector.load %arg1[%c1_35, %c0_36, %c0_37] : memref<3x384x128xbf16, #tpu.memory_space<vmem>>, vector<1x384x128xbf16>
    %20 = vector.shape_cast %19 : vector<1x384x128xbf16> to vector<384x128xbf16>
    %cst_38 = arith.constant dense<0.000000e+00> : vector<128x128xf32>
    %21 = tpu.matmul %18, %20, %cst_38 {dimension_numbers = #tpu.dot_dimension_numbers<[1], [0], [0], [1], [0, 0, 1, 1], [], []>} : vector<128x384xbf16>, vector<384x128xbf16>, vector<128x128xf32> -> vector<128x128xf32>
    %22 = arith.addf %12, %21 : vector<128x128xf32>
    %c0_39 = arith.constant 0 : index
    %c2 = arith.constant 2 : index
    %c7_40 = arith.constant 7 : index
    %c0_41 = arith.constant 0 : index
    %23 = vector.load %arg8[%c0_39, %c2, %c7_40, %c0_41] : memref<2x10x17x128xf32, #tpu.memory_space<vmem>>, vector<2x8x8x128xf32>
    %c0_42 = arith.constant 0 : index
    %c2_43 = arith.constant 2 : index
    %c8_44 = arith.constant 8 : index
    %c0_45 = arith.constant 0 : index
    %24 = vector.load %arg8[%c0_42, %c2_43, %c8_44, %c0_45] : memref<2x10x17x128xf32, #tpu.memory_space<vmem>>, vector<2x8x8x128xf32>
    %c0_46 = arith.constant 0 : index
    %c2_47 = arith.constant 2 : index
    %c9_48 = arith.constant 9 : index
    %c0_49 = arith.constant 0 : index
    %25 = vector.load %arg8[%c0_46, %c2_47, %c9_48, %c0_49] : memref<2x10x17x128xf32, #tpu.memory_space<vmem>>, vector<2x8x8x128xf32>
    %26 = tpu.concatenate %23, %24, %25 in 3 : vector<2x8x8x128xf32>, vector<2x8x8x128xf32>, vector<2x8x8x128xf32> -> vector<2x8x8x384xf32>
    %27 = vector.shape_cast %26 : vector<2x8x8x384xf32> to vector<128x384xf32>
    %28 = arith.truncf %27 : vector<128x384xf32> to vector<128x384xbf16>
    %c2_50 = arith.constant 2 : index
    %c0_51 = arith.constant 0 : index
    %c0_52 = arith.constant 0 : index
    %29 = vector.load %arg1[%c2_50, %c0_51, %c0_52] : memref<3x384x128xbf16, #tpu.memory_space<vmem>>, vector<1x384x128xbf16>
    %30 = vector.shape_cast %29 : vector<1x384x128xbf16> to vector<384x128xbf16>
    %cst_53 = arith.constant dense<0.000000e+00> : vector<128x128xf32>
    %31 = tpu.matmul %28, %30, %cst_53 {dimension_numbers = #tpu.dot_dimension_numbers<[1], [0], [0], [1], [0, 0, 1, 1], [], []>} : vector<128x384xbf16>, vector<384x128xbf16>, vector<128x128xf32> -> vector<128x128xf32>
    %32 = arith.addf %22, %31 : vector<128x128xf32>
    %c0_54 = arith.constant 0 : index
    %c0_55 = arith.constant 0 : index
    %33 = vector.load %arg3[%c0_54, %c0_55] : memref<1x128xf32, #tpu.memory_space<vmem>>, vector<1x128xf32>
    %34 = vector.broadcast %33 : vector<1x128xf32> to vector<128x128xf32>
    %35 = arith.mulf %32, %34 : vector<128x128xf32>
    %c0_56 = arith.constant 0 : index
    %c0_57 = arith.constant 0 : index
    %36 = vector.load %arg4[%c0_56, %c0_57] : memref<1x128xf32, #tpu.memory_space<vmem>>, vector<1x128xf32>
    %37 = vector.broadcast %36 : vector<1x128xf32> to vector<128x128xf32>
    %38 = arith.addf %35, %37 : vector<128x128xf32>
    %cst_58 = arith.constant 0.000000e+00 : f32
    %39 = vector.broadcast %cst_58 : f32 to vector<128x128xf32>
    %40 = arith.maximumf %38, %39 : vector<128x128xf32>
    %41 = vector.shape_cast %40 : vector<128x128xf32> to vector<2x8x8x128xf32>
    %c0_59 = arith.constant 0 : index
    %c1_60 = arith.constant 1 : index
    %c8_61 = arith.constant 8 : index
    %c0_62 = arith.constant 0 : index
    %42 = vector.load %arg8[%c0_59, %c1_60, %c8_61, %c0_62] : memref<2x10x17x128xf32, #tpu.memory_space<vmem>>, vector<2x8x8x128xf32>
    tpu.vector_store %arg8[%c0_59, %c1_60, %c8_61, %c0_62], %41 {strides = array<i32>} : memref<2x10x17x128xf32, #tpu.memory_space<vmem>>, vector<2x8x8x128xf32>,
    %c0_63 = arith.constant 0 : index
    %c0_64 = arith.constant 0 : index
    %c7_65 = arith.constant 7 : index
    %c0_66 = arith.constant 0 : index
    %43 = vector.load %arg8[%c0_63, %c0_64, %c7_65, %c0_66] : memref<2x10x17x128xf32, #tpu.memory_space<vmem>>, vector<2x8x8x128xf32>
    %c0_67 = arith.constant 0 : index
    %c0_68 = arith.constant 0 : index
    %c8_69 = arith.constant 8 : index
    %c0_70 = arith.constant 0 : index
    %44 = vector.load %arg8[%c0_67, %c0_68, %c8_69, %c0_70] : memref<2x10x17x128xf32, #tpu.memory_space<vmem>>, vector<2x8x8x128xf32>
    %c0_71 = arith.constant 0 : index
    %c0_72 = arith.constant 0 : index
    %c9_73 = arith.constant 9 : index
    %c0_74 = arith.constant 0 : index
    %45 = vector.load %arg8[%c0_71, %c0_72, %c9_73, %c0_74] : memref<2x10x17x128xf32, #tpu.memory_space<vmem>>, vector<2x8x8x128xf32>
    %46 = tpu.concatenate %43, %44, %45 in 3 : vector<2x8x8x128xf32>, vector<2x8x8x128xf32>, vector<2x8x8x128xf32> -> vector<2x8x8x384xf32>
    %47 = vector.shape_cast %46 : vector<2x8x8x384xf32> to vector<128x384xf32>
    %48 = arith.truncf %47 : vector<128x384xf32> to vector<128x384xbf16>
    %c0_75 = arith.constant 0 : index
    %c0_76 = arith.constant 0 : index
    %c0_77 = arith.constant 0 : index
    %49 = vector.load %arg2[%c0_75, %c0_76, %c0_77] : memref<3x384x128xbf16, #tpu.memory_space<vmem>>, vector<1x384x128xbf16>
    %50 = vector.shape_cast %49 : vector<1x384x128xbf16> to vector<384x128xbf16>
    %cst_78 = arith.constant dense<0.000000e+00> : vector<128x128xf32>
    %51 = tpu.matmul %48, %50, %cst_78 {dimension_numbers = #tpu.dot_dimension_numbers<[1], [0], [0], [1], [0, 0, 1, 1], [], []>} : vector<128x384xbf16>, vector<384x128xbf16>, vector<128x128xf32> -> vector<128x128xf32>
    %c0_79 = arith.constant 0 : index
    %c1_80 = arith.constant 1 : index
    %c7_81 = arith.constant 7 : index
    %c0_82 = arith.constant 0 : index
    %52 = vector.load %arg8[%c0_79, %c1_80, %c7_81, %c0_82] : memref<2x10x17x128xf32, #tpu.memory_space<vmem>>, vector<2x8x8x128xf32>
    %c0_83 = arith.constant 0 : index
    %c1_84 = arith.constant 1 : index
    %c8_85 = arith.constant 8 : index
    %c0_86 = arith.constant 0 : index
    %53 = vector.load %arg8[%c0_83, %c1_84, %c8_85, %c0_86] : memref<2x10x17x128xf32, #tpu.memory_space<vmem>>, vector<2x8x8x128xf32>
    %c0_87 = arith.constant 0 : index
    %c1_88 = arith.constant 1 : index
    %c9_89 = arith.constant 9 : index
    %c0_90 = arith.constant 0 : index
    %54 = vector.load %arg8[%c0_87, %c1_88, %c9_89, %c0_90] : memref<2x10x17x128xf32, #tpu.memory_space<vmem>>, vector<2x8x8x128xf32>
    %55 = tpu.concatenate %52, %53, %54 in 3 : vector<2x8x8x128xf32>, vector<2x8x8x128xf32>, vector<2x8x8x128xf32> -> vector<2x8x8x384xf32>
    %56 = vector.shape_cast %55 : vector<2x8x8x384xf32> to vector<128x384xf32>
    %57 = arith.truncf %56 : vector<128x384xf32> to vector<128x384xbf16>
    %c1_91 = arith.constant 1 : index
    %c0_92 = arith.constant 0 : index
    %c0_93 = arith.constant 0 : index
    %58 = vector.load %arg2[%c1_91, %c0_92, %c0_93] : memref<3x384x128xbf16, #tpu.memory_space<vmem>>, vector<1x384x128xbf16>
    %59 = vector.shape_cast %58 : vector<1x384x128xbf16> to vector<384x128xbf16>
    %cst_94 = arith.constant dense<0.000000e+00> : vector<128x128xf32>
    %60 = tpu.matmul %57, %59, %cst_94 {dimension_numbers = #tpu.dot_dimension_numbers<[1], [0], [0], [1], [0, 0, 1, 1], [], []>} : vector<128x384xbf16>, vector<384x128xbf16>, vector<128x128xf32> -> vector<128x128xf32>
    %61 = arith.addf %51, %60 : vector<128x128xf32>
    %c0_95 = arith.constant 0 : index
    %c2_96 = arith.constant 2 : index
    %c7_97 = arith.constant 7 : index
    %c0_98 = arith.constant 0 : index
    %62 = vector.load %arg8[%c0_95, %c2_96, %c7_97, %c0_98] : memref<2x10x17x128xf32, #tpu.memory_space<vmem>>, vector<2x8x8x128xf32>
    %c0_99 = arith.constant 0 : index
    %c2_100 = arith.constant 2 : index
    %c8_101 = arith.constant 8 : index
    %c0_102 = arith.constant 0 : index
    %63 = vector.load %arg8[%c0_99, %c2_100, %c8_101, %c0_102] : memref<2x10x17x128xf32, #tpu.memory_space<vmem>>, vector<2x8x8x128xf32>
    %c0_103 = arith.constant 0 : index
    %c2_104 = arith.constant 2 : index
    %c9_105 = arith.constant 9 : index
    %c0_106 = arith.constant 0 : index
    %64 = vector.load %arg8[%c0_103, %c2_104, %c9_105, %c0_106] : memref<2x10x17x128xf32, #tpu.memory_space<vmem>>, vector<2x8x8x128xf32>
    %65 = tpu.concatenate %62, %63, %64 in 3 : vector<2x8x8x128xf32>, vector<2x8x8x128xf32>, vector<2x8x8x128xf32> -> vector<2x8x8x384xf32>
    %66 = vector.shape_cast %65 : vector<2x8x8x384xf32> to vector<128x384xf32>
    %67 = arith.truncf %66 : vector<128x384xf32> to vector<128x384xbf16>
    %c2_107 = arith.constant 2 : index
    %c0_108 = arith.constant 0 : index
    %c0_109 = arith.constant 0 : index
    %68 = vector.load %arg2[%c2_107, %c0_108, %c0_109] : memref<3x384x128xbf16, #tpu.memory_space<vmem>>, vector<1x384x128xbf16>
    %69 = vector.shape_cast %68 : vector<1x384x128xbf16> to vector<384x128xbf16>
    %cst_110 = arith.constant dense<0.000000e+00> : vector<128x128xf32>
    %70 = tpu.matmul %67, %69, %cst_110 {dimension_numbers = #tpu.dot_dimension_numbers<[1], [0], [0], [1], [0, 0, 1, 1], [], []>} : vector<128x384xbf16>, vector<384x128xbf16>, vector<128x128xf32> -> vector<128x128xf32>
    %71 = arith.addf %61, %70 : vector<128x128xf32>
    %c0_111 = arith.constant 0 : index
    %c0_112 = arith.constant 0 : index
    %72 = vector.load %arg5[%c0_111, %c0_112] : memref<1x128xf32, #tpu.memory_space<vmem>>, vector<1x128xf32>
    %73 = vector.broadcast %72 : vector<1x128xf32> to vector<128x128xf32>
    %74 = arith.mulf %71, %73 : vector<128x128xf32>
    %c0_113 = arith.constant 0 : index
    %c0_114 = arith.constant 0 : index
    %75 = vector.load %arg6[%c0_113, %c0_114] : memref<1x128xf32, #tpu.memory_space<vmem>>, vector<1x128xf32>
    %76 = vector.broadcast %75 : vector<1x128xf32> to vector<128x128xf32>
    %77 = arith.addf %74, %76 : vector<128x128xf32>
    %c0_115 = arith.constant 0 : index
    %c0_116 = arith.constant 0 : index
    %c0_117 = arith.constant 0 : index
    %c0_118 = arith.constant 0 : index
    %78 = vector.load %arg0[%c0_115, %c0_116, %c0_117, %c0_118] : memref<2x8x8x128xf32, #tpu.memory_space<vmem>>, vector<2x8x8x128xf32>
    %79 = vector.shape_cast %78 : vector<2x8x8x128xf32> to vector<128x128xf32>
    %80 = arith.addf %77, %79 : vector<128x128xf32>
    %cst_119 = arith.constant 0.000000e+00 : f32
    %81 = vector.broadcast %cst_119 : f32 to vector<128x128xf32>
    %82 = arith.maximumf %80, %81 : vector<128x128xf32>
    %c0_120 = arith.constant 0 : index
    %c0_121 = arith.constant 0 : index
    %83 = vector.load %arg7[%c0_120, %c0_121] : memref<128x128xf32, #tpu.memory_space<vmem>>, vector<128x128xf32>
    tpu.vector_store %arg7[%c0_120, %c0_121], %82 {strides = array<i32>} : memref<128x128xf32, #tpu.memory_space<vmem>>, vector<128x128xf32>,
    return
  }
}

</mosaic_0001>

<llo_original>
// kernel: resblock_forward.1
$region0: #{resblock_forward.1}
  #allocation0 [shape = 'u32[]', space=smem, size = 0x4, offset = 0x4, fixed_abs, tag = 'smem constant byte address 0x4 - core index']
  #allocation1 [shape = 'u32[72,128]{1,0:T(1,128)}', space=vmem, size = 0x9000, scoped, tag = 'internal scratch']
  #allocation2 [shape = 'f32[2,10,17,128]{3,2,1,0:T(8,128)}', space=vmem, size = 0x3c000, scoped, tag = 'scratch operand']
  %s0 = inlined_call_operand.hbm [shape: f32[2,8,8,128], index: 0, kind: input, shape index: {}]
  %s1 = inlined_call_operand.hbm [shape: bf16[3,384,128], index: 1, kind: input, shape index: {}]
  %s2 = inlined_call_operand.hbm [shape: bf16[3,384,128], index: 2, kind: input, shape index: {}]
  %s3 = inlined_call_operand.vmem [shape: f32[1,128], index: 3, kind: input, shape index: {}]
  %s4 = inlined_call_operand.vmem [shape: f32[1,128], index: 4, kind: input, shape index: {}]
  %s5 = inlined_call_operand.vmem [shape: f32[1,128], index: 5, kind: input, shape index: {}]
  %s6 = inlined_call_operand.vmem [shape: f32[1,128], index: 6, kind: input, shape index: {}]
  %s7 = inlined_call_operand.hbm [shape: f32[128,128], index: 7, kind: output, shape index: {}]
  %s8 = sld [smem:[#allocation0]]
  $region50: #{resblock_forward.1} parent=0
    _
  %s10 = ssub.s32 1, %s8
  %s11 = scalar_select 0, %s10, %s8
  $region1: #{resblock_forward.1} parent=0
    #allocation3 [shape = 'u8[65536]{0}', space=vmem, size = 0x10000, scoped, tag = 'input window, operand 0, single buffered']
    #allocation4 [shape = 's32[1]{0}', space=sflag, size = 0x4, scoped, tag = 'scoped memory for resblock_forward.1']
    #allocation5 [shape = 's32[1]{0}', space=sflag, size = 0x4, scoped, tag = 'scoped memory for resblock_forward.1']
    #allocation6 [shape = 'u8[294912]{0}', space=vmem, size = 0x48000, scoped, tag = 'input window, operand 1, single buffered']
    #allocation7 [shape = 's32[1]{0}', space=sflag, size = 0x4, scoped, tag = 'scoped memory for resblock_forward.1']
    #allocation8 [shape = 'u8[294912]{0}', space=vmem, size = 0x48000, scoped, tag = 'input window, operand 2, single buffered']
    #allocation9 [shape = 'u8[65536]{0}', space=vmem, size = 0x10000, scoped, tag = 'output window, operand 0, single buffered']
    %12 = vsyncpa [#allocation4], 0
    %13 = vsyncpa [#allocation7], 0
    %14 = vsyncpa [#allocation5], 0
    // Predicated region
    $region2: #{resblock_forward.1} parent=1 // pred_check
      _
    $region3: #{resblock_forward.1} parent=1 // pred_check_branch
      %16 = sbr.rel (0) target = $region5
    $region4: #{resblock_forward.1} parent=1 // pred_region
      %18 = vsyncadd [#allocation4], 0
      %s19 = sshll.u32 %s0, 4
      %s20 = int_to_ptr.hbm [resolvable:$true] %s19
      %s21 = sshll.u32 [#allocation3], 4
      %s22 = int_to_ptr.vmem [resolvable:$true] %s21
      %27 = dma.hbm_to_vmem [thread:$0]  %s20, 2048, %s22, [#allocation4], 128, 128, 8
    $region5: #{resblock_forward.1} parent=1 // pred_fallthru
      _
    // Predicated region
    $region6: #{resblock_forward.1} parent=1 // pred_check
      _
    $region7: #{resblock_forward.1} parent=1 // pred_check_branch
      %29 = sbr.rel (0) target = $region9
    $region8: #{resblock_forward.1} parent=1 // pred_region
      %31 = vsyncadd [#allocation7], 0
      %s32 = sshll.u32 %s1, 4
      %s33 = int_to_ptr.hbm [resolvable:$true] %s32
      %s34 = sshll.u32 [#allocation6], 4
      %s35 = int_to_ptr.vmem [resolvable:$true] %s34
      %40 = dma.hbm_to_vmem [thread:$0]  %s33, 9216, %s35, [#allocation7], 64, 64, 4
    $region9: #{resblock_forward.1} parent=1 // pred_fallthru
      _
    // Predicated region
    $region10: #{resblock_forward.1} parent=1 // pred_check
      _
    $region11: #{resblock_forward.1} parent=1 // pred_check_branch
      %42 = sbr.rel (0) target = $region13
    $region12: #{resblock_forward.1} parent=1 // pred_region
      %44 = vsyncadd [#allocation7], 0
      %s45 = sshll.u32 %s2, 4
      %s46 = int_to_ptr.hbm [resolvable:$true] %s45
      %s47 = sshll.u32 [#allocation8], 4
      %s48 = int_to_ptr.vmem [resolvable:$true] %s47
      %53 = dma.hbm_to_vmem [thread:$0]  %s46, 9216, %s48, [#allocation7], 64, 64, 4
    $region13: #{resblock_forward.1} parent=1 // pred_fallthru
      _
    // Predicated region
    $region14: #{resblock_forward.1} parent=1 // pred_check
      _
    $region15: #{resblock_forward.1} parent=1 // pred_check_branch
      %55 = sbr.rel (0) target = $region17
    $region16: #{resblock_forward.1} parent=1 // pred_region
      _
    $region17: #{resblock_forward.1} parent=1 // pred_fallthru
      _
    // Predicated region
    $region18: #{resblock_forward.1} parent=1 // pred_check
      _
    $region19: #{resblock_forward.1} parent=1 // pred_check_branch
      %57 = sbr.rel (0) target = $region21
    $region20: #{resblock_forward.1} parent=1 // pred_region
      _
    $region21: #{resblock_forward.1} parent=1 // pred_fallthru
      _
    // Predicated region
    $region22: #{resblock_forward.1} parent=1 // pred_check
      _
    $region23: #{resblock_forward.1} parent=1 // pred_check_branch
      %59 = sbr.rel (0) target = $region25
    $region24: #{resblock_forward.1} parent=1 // pred_region
      _
    $region25: #{resblock_forward.1} parent=1 // pred_fallthru
      _
    // Predicated region
    $region26: #{resblock_forward.1} parent=1 // pred_check
      _
    $region27: #{resblock_forward.1} parent=1 // pred_check_branch
      %61 = sbr.rel (0) target = $region29
    $region28: #{resblock_forward.1} parent=1 // pred_region
      _
    $region29: #{resblock_forward.1} parent=1 // pred_fallthru
      _
    // Predicated region
    $region30: #{resblock_forward.1} parent=1 // pred_check
      _
    $region31: #{resblock_forward.1} parent=1 // pred_check_branch
      %63 = sbr.rel (0) target = $region33
    $region32: #{resblock_forward.1} parent=1 // pred_region
      %65 = dma.done [#allocation4], 2048
    $region33: #{resblock_forward.1} parent=1 // pred_fallthru
      _
    // Predicated region
    $region34: #{resblock_forward.1} parent=1 // pred_check
      _
    $region35: #{resblock_forward.1} parent=1 // pred_check_branch
      %67 = sbr.rel (0) target = $region37
    $region36: #{resblock_forward.1} parent=1 // pred_region
      %69 = dma.done [#allocation7], 9216
    $region37: #{resblock_forward.1} parent=1 // pred_fallthru
      _
    // Predicated region
    $region38: #{resblock_forward.1} parent=1 // pred_check
      _
    $region39: #{resblock_forward.1} parent=1 // pred_check_branch
      %71 = sbr.rel (0) target = $region41
    $region40: #{resblock_forward.1} parent=1 // pred_region
      %73 = dma.done [#allocation7], 9216
    $region41: #{resblock_forward.1} parent=1 // pred_fallthru
      _
    %74 = vst [vmem:[#allocation2] sm:$0xff] 0.0
    %75 = vst [vmem:[#allocation2 + $0x8] sm:$0xff] 0.0
    %76 = vst [vmem:[#allocation2 + $0x10] sm:$0x1] 0.0
    %77 = vst [vmem:[#allocation2 + $0x18] sm:$0xff] 0.0
    %78 = vst [vmem:[#allocation2 + $0x20] sm:$0xff] 0.0
    %79 = vst [vmem:[#allocation2 + $0x28] sm:$0x1] 0.0
    %80 = vst [vmem:[#allocation2 + $0x30] sm:$0xff] 0.0
    %81 = vst [vmem:[#allocation2 + $0x38] sm:$0xff] 0.0
    %82 = vst [vmem:[#allocation2 + $0x40] sm:$0x1] 0.0
    %83 = vst [vmem:[#allocation2 + $0x48] sm:$0xff] 0.0
    %84 = vst [vmem:[#allocation2 + $0x50] sm:$0xff] 0.0
    %85 = vst [vmem:[#allocation2 + $0x58] sm:$0x1] 0.0
    %86 = vst [vmem:[#allocation2 + $0x60] sm:$0xff] 0.0
    %87 = vst [vmem:[#allocation2 + $0x68] sm:$0xff] 0.0
    %88 = vst [vmem:[#allocation2 + $0x70] sm:$0x1] 0.0
    %89 = vst [vmem:[#allocation2 + $0x78] sm:$0xff] 0.0
    %90 = vst [vmem:[#allocation2 + $0x80] sm:$0xff] 0.0
    %91 = vst [vmem:[#allocation2 + $0x88] sm:$0x1] 0.0
    %92 = vst [vmem:[#allocation2 + $0x90] sm:$0xff] 0.0
    %93 = vst [vmem:[#allocation2 + $0x98] sm:$0xff] 0.0
    %94 = vst [vmem:[#allocation2 + $0xa0] sm:$0x1] 0.0
    %95 = vst [vmem:[#allocation2 + $0xa8] sm:$0xff] 0.0
    %96 = vst [vmem:[#allocation2 + $0xb0] sm:$0xff] 0.0
    %97 = vst [vmem:[#allocation2 + $0xb8] sm:$0x1] 0.0
    %98 = vst [vmem:[#allocation2 + $0xc0] sm:$0xff] 0.0
    %99 = vst [vmem:[#allocation2 + $0xc8] sm:$0xff] 0.0
    %100 = vst [vmem:[#allocation2 + $0xd0] sm:$0x1] 0.0
    %101 = vst [vmem:[#allocation2 + $0xd8] sm:$0xff] 0.0
    %102 = vst [vmem:[#allocation2 + $0xe0] sm:$0xff] 0.0
    %103 = vst [vmem:[#allocation2 + $0xe8] sm:$0x1] 0.0
    %104 = vst [vmem:[#allocation2 + $0xf0] sm:$0xff] 0.0
    %105 = vst [vmem:[#allocation2 + $0xf8] sm:$0xff] 0.0
    %106 = vst [vmem:[#allocation2 + $0x100] sm:$0x1] 0.0
    %107 = vst [vmem:[#allocation2 + $0x108] sm:$0xff] 0.0
    %108 = vst [vmem:[#allocation2 + $0x110] sm:$0xff] 0.0
    %109 = vst [vmem:[#allocation2 + $0x118] sm:$0x1] 0.0
    %110 = vst [vmem:[#allocation2 + $0x120] sm:$0xff] 0.0
    %111 = vst [vmem:[#allocation2 + $0x128] sm:$0xff] 0.0
    %112 = vst [vmem:[#allocation2 + $0x130] sm:$0x1] 0.0
    %113 = vst [vmem:[#allocation2 + $0x138] sm:$0xff] 0.0
    %114 = vst [vmem:[#allocation2 + $0x140] sm:$0xff] 0.0
    %115 = vst [vmem:[#allocation2 + $0x148] sm:$0x1] 0.0
    %116 = vst [vmem:[#allocation2 + $0x150] sm:$0xff] 0.0
    %117 = vst [vmem:[#allocation2 + $0x158] sm:$0xff] 0.0
    %118 = vst [vmem:[#allocation2 + $0x160] sm:$0x1] 0.0
    %119 = vst [vmem:[#allocation2 + $0x168] sm:$0xff] 0.0
    %120 = vst [vmem:[#allocation2 + $0x170] sm:$0xff] 0.0
    %121 = vst [vmem:[#allocation2 + $0x178] sm:$0x1] 0.0
    %122 = vst [vmem:[#allocation2 + $0x180] sm:$0xff] 0.0
    %123 = vst [vmem:[#allocation2 + $0x188] sm:$0xff] 0.0
    %124 = vst [vmem:[#allocation2 + $0x190] sm:$0x1] 0.0
    %125 = vst [vmem:[#allocation2 + $0x198] sm:$0xff] 0.0
    %126 = vst [vmem:[#allocation2 + $0x1a0] sm:$0xff] 0.0
    %127 = vst [vmem:[#allocation2 + $0x1a8] sm:$0x1] 0.0
    %128 = vst [vmem:[#allocation2 + $0x1b0] sm:$0xff] 0.0
    %129 = vst [vmem:[#allocation2 + $0x1b8] sm:$0xff] 0.0
    %130 = vst [vmem:[#allocation2 + $0x1c0] sm:$0x1] 0.0
    %131 = vst [vmem:[#allocation2 + $0x1c8] sm:$0xff] 0.0
    %132 = vst [vmem:[#allocation2 + $0x1d0] sm:$0xff] 0.0
    %133 = vst [vmem:[#allocation2 + $0x1d8] sm:$0x1] 0.0
    %v134 = vld [vmem:[#allocation3] sm:$0xff]
    %v135 = vld [vmem:[#allocation3 + $0x8] sm:$0xff]
    %v136 = vld [vmem:[#allocation3 + $0x10] sm:$0xff]
    %v137 = vld [vmem:[#allocation3 + $0x18] sm:$0xff]
    %v138 = vld [vmem:[#allocation3 + $0x20] sm:$0xff]
    %v139 = vld [vmem:[#allocation3 + $0x28] sm:$0xff]
    %v140 = vld [vmem:[#allocation3 + $0x30] sm:$0xff]
    %v141 = vld [vmem:[#allocation3 + $0x38] sm:$0xff]
    %v142 = vld [vmem:[#allocation3 + $0x40] sm:$0xff]
    %v143 = vld [vmem:[#allocation3 + $0x48] sm:$0xff]
    %v144 = vld [vmem:[#allocation3 + $0x50] sm:$0xff]
    %v145 = vld [vmem:[#allocation3 + $0x58] sm:$0xff]
    %v146 = vld [vmem:[#allocation3 + $0x60] sm:$0xff]
    %v147 = vld [vmem:[#allocation3 + $0x68] sm:$0xff]
    %v148 = vld [vmem:[#allocation3 + $0x70] sm:$0xff]
    %v149 = vld [vmem:[#allocation3 + $0x78] sm:$0xff]
    %s150 = scalar_lea.vmem [#allocation2], 24
    %151 = vst [vmem:[%s150 + $0x8] sm:$0xff] %v134
    %152 = vst [vmem:[%s150 + $0x20] sm:$0xff] %v135
    %153 = vst [vmem:[%s150 + $0x38] sm:$0xff] %v136
    %154 = vst [vmem:[%s150 + $0x50] sm:$0xff] %v137
    %155 = vst [vmem:[%s150 + $0x68] sm:$0xff] %v138
    %156 = vst [vmem:[%s150 + $0x80] sm:$0xff] %v139
    %157 = vst [vmem:[%s150 + $0x98] sm:$0xff] %v140
    %158 = vst [vmem:[%s150 + $0xb0] sm:$0xff] %v141
    %159 = vst [vmem:[%s150 + $0xf8] sm:$0xff] %v142
    %160 = vst [vmem:[%s150 + $0x110] sm:$0xff] %v143
    %161 = vst [vmem:[%s150 + $0x128] sm:$0xff] %v144
    %162 = vst [vmem:[%s150 + $0x140] sm:$0xff] %v145
    %163 = vst [vmem:[%s150 + $0x158] sm:$0xff] %v146
    %164 = vst [vmem:[%s150 + $0x170] sm:$0xff] %v147
    %165 = vst [vmem:[%s150 + $0x188] sm:$0xff] %v148
    %166 = vst [vmem:[%s150 + $0x1a0] sm:$0xff] %v149
    %v167 = vld [vmem:[#allocation2 + $0x7] sm:$0xff]
    %v168 = vld [vmem:[#allocation2 + $0x1f] sm:$0xff]
    %v169 = vld [vmem:[#allocation2 + $0x37] sm:$0xff]
    %v170 = vld [vmem:[#allocation2 + $0x4f] sm:$0xff]
    %v171 = vld [vmem:[#allocation2 + $0x67] sm:$0xff]
    %v172 = vld [vmem:[#allocation2 + $0x7f] sm:$0xff]
    %v173 = vld [vmem:[#allocation2 + $0x97] sm:$0xff]
    %v174 = vld [vmem:[#allocation2 + $0xaf] sm:$0xff]
    %v175 = vld [vmem:[#allocation2 + $0xf7] sm:$0xff]
    %v176 = vld [vmem:[#allocation2 + $0x10f] sm:$0xff]
    %v177 = vld [vmem:[#allocation2 + $0x127] sm:$0xff]
    %v178 = vld [vmem:[#allocation2 + $0x13f] sm:$0xff]
    %v179 = vld [vmem:[#allocation2 + $0x157] sm:$0xff]
    %v180 = vld [vmem:[#allocation2 + $0x16f] sm:$0xff]
    %v181 = vld [vmem:[#allocation2 + $0x187] sm:$0xff]
    %v182 = vld [vmem:[#allocation2 + $0x19f] sm:$0xff]
    %v183 = vld [vmem:[#allocation2 + $0x8] sm:$0xff]
    %v184 = vld [vmem:[#allocation2 + $0x20] sm:$0xff]
    %v185 = vld [vmem:[#allocation2 + $0x38] sm:$0xff]
    %v186 = vld [vmem:[#allocation2 + $0x50] sm:$0xff]
    %v187 = vld [vmem:[#allocation2 + $0x68] sm:$0xff]
    %v188 = vld [vmem:[#allocation2 + $0x80] sm:$0xff]
    %v189 = vld [vmem:[#allocation2 + $0x98] sm:$0xff]
    %v190 = vld [vmem:[#allocation2 + $0xb0] sm:$0xff]
    %v191 = vld [vmem:[#allocation2 + $0xf8] sm:$0xff]
    %v192 = vld [vmem:[#allocation2 + $0x110] sm:$0xff]
    %v193 = vld [vmem:[#allocation2 + $0x128] sm:$0xff]
    %v194 = vld [vmem:[#allocation2 + $0x140] sm:$0xff]
    %v195 = vld [vmem:[#allocation2 + $0x158] sm:$0xff]
    %v196 = vld [vmem:[#allocation2 + $0x170] sm:$0xff]
    %v197 = vld [vmem:[#allocation2 + $0x188] sm:$0xff]
    %v198 = vld [vmem:[#allocation2 + $0x1a0] sm:$0xff]
    %v199 = vld [vmem:[#allocation2 + $0x9] sm:$0xff]
    %v200 = vld [vmem:[#allocation2 + $0x21] sm:$0xff]
    %v201 = vld [vmem:[#allocation2 + $0x39] sm:$0xff]
    %v202 = vld [vmem:[#allocation2 + $0x51] sm:$0xff]
    %v203 = vld [vmem:[#allocation2 + $0x69] sm:$0xff]
    %v204 = vld [vmem:[#allocation2 + $0x81] sm:$0xff]
    %v205 = vld [vmem:[#allocation2 + $0x99] sm:$0xff]
    %v206 = vld [vmem:[#allocation2 + $0xb1] sm:$0xff]
    %v207 = vld [vmem:[#allocation2 + $0xf9] sm:$0xff]
    %v208 = vld [vmem:[#allocation2 + $0x111] sm:$0xff]
    %v209 = vld [vmem:[#allocation2 + $0x129] sm:$0xff]
    %v210 = vld [vmem:[#allocation2 + $0x141] sm:$0xff]
    %v211 = vld [vmem:[#allocation2 + $0x159] sm:$0xff]
    %v212 = vld [vmem:[#allocation2 + $0x171] sm:$0xff]
    %v213 = vld [vmem:[#allocation2 + $0x189] sm:$0xff]
    %v214 = vld [vmem:[#allocation2 + $0x1a1] sm:$0xff]
    %v215 = vpack.c.bf16 %v168, %v167
    %v216 = vpack.c.bf16 %v184, %v183
    %v217 = vpack.c.bf16 %v200, %v199
    %v218 = vpack.c.bf16 %v170, %v169
    %v219 = vpack.c.bf16 %v186, %v185
    %v220 = vpack.c.bf16 %v202, %v201
    %v221 = vpack.c.bf16 %v172, %v171
    %v222 = vpack.c.bf16 %v188, %v187
    %v223 = vpack.c.bf16 %v204, %v203
    %v224 = vpack.c.bf16 %v174, %v173
    %v225 = vpack.c.bf16 %v190, %v189
    %v226 = vpack.c.bf16 %v206, %v205
    %v227 = vpack.c.bf16 %v176, %v175
    %v228 = vpack.c.bf16 %v192, %v191
    %v229 = vpack.c.bf16 %v208, %v207
    %v230 = vpack.c.bf16 %v178, %v177
    %v231 = vpack.c.bf16 %v194, %v193
    %v232 = vpack.c.bf16 %v210, %v209
    %v233 = vpack.c.bf16 %v180, %v179
    %v234 = vpack.c.bf16 %v196, %v195
    %v235 = vpack.c.bf16 %v212, %v211
    %v236 = vpack.c.bf16 %v182, %v181
    %v237 = vpack.c.bf16 %v198, %v197
    %v238 = vpack.c.bf16 %v214, %v213
    %v239 = vld [vmem:[#allocation6] sm:$0xf]
    %v240 = vld [vmem:[#allocation6 + $0x4] sm:$0xf]
    %v241 = vld [vmem:[#allocation6 + $0x8] sm:$0xf]
    %v242 = vld [vmem:[#allocation6 + $0xc] sm:$0xf]
    %v243 = vld [vmem:[#allocation6 + $0x10] sm:$0xf]
    %v244 = vld [vmem:[#allocation6 + $0x14] sm:$0xf]
    %v245 = vld [vmem:[#allocation6 + $0x18] sm:$0xf]
    %v246 = vld [vmem:[#allocation6 + $0x1c] sm:$0xf]
    %v247 = vld [vmem:[#allocation6 + $0x20] sm:$0xf]
    %v248 = vld [vmem:[#allocation6 + $0x24] sm:$0xf]
    %v249 = vld [vmem:[#allocation6 + $0x28] sm:$0xf]
    %v250 = vld [vmem:[#allocation6 + $0x2c] sm:$0xf]
    %v251 = vld [vmem:[#allocation6 + $0x30] sm:$0xf]
    %v252 = vld [vmem:[#allocation6 + $0x34] sm:$0xf]
    %v253 = vld [vmem:[#allocation6 + $0x38] sm:$0xf]
    %v254 = vld [vmem:[#allocation6 + $0x3c] sm:$0xf]
    %v255 = vld [vmem:[#allocation6 + $0x40] sm:$0xf]
    %v256 = vld [vmem:[#allocation6 + $0x44] sm:$0xf]
    %v257 = vld [vmem:[#allocation6 + $0x48] sm:$0xf]
    %v258 = vld [vmem:[#allocation6 + $0x4c] sm:$0xf]
    %v259 = vld [vmem:[#allocation6 + $0x50] sm:$0xf]
    %v260 = vld [vmem:[#allocation6 + $0x54] sm:$0xf]
    %v261 = vld [vmem:[#allocation6 + $0x58] sm:$0xf]
    %v262 = vld [vmem:[#allocation6 + $0x5c] sm:$0xf]
    %v263 = vld [vmem:[#allocation6 + $0x60] sm:$0xf]
    %v264 = vld [vmem:[#allocation6 + $0x64] sm:$0xf]
    %v265 = vld [vmem:[#allocation6 + $0x68] sm:$0xf]
    %v266 = vld [vmem:[#allocation6 + $0x6c] sm:$0xf]
    %v267 = vld [vmem:[#allocation6 + $0x70] sm:$0xf]
    %v268 = vld [vmem:[#allocation6 + $0x74] sm:$0xf]
    %v269 = vld [vmem:[#allocation6 + $0x78] sm:$0xf]
    %v270 = vld [vmem:[#allocation6 + $0x7c] sm:$0xf]
    %v271 = vld [vmem:[#allocation6 + $0x80] sm:$0xf]
    %v272 = vld [vmem:[#allocation6 + $0x84] sm:$0xf]
    %v273 = vld [vmem:[#allocation6 + $0x88] sm:$0xf]
    %v274 = vld [vmem:[#allocation6 + $0x8c] sm:$0xf]
    %v275 = vld [vmem:[#allocation6 + $0x90] sm:$0xf]
    %v276 = vld [vmem:[#allocation6 + $0x94] sm:$0xf]
    %v277 = vld [vmem:[#allocation6 + $0x98] sm:$0xf]
    %v278 = vld [vmem:[#allocation6 + $0x9c] sm:$0xf]
    %v279 = vld [vmem:[#allocation6 + $0xa0] sm:$0xf]
    %v280 = vld [vmem:[#allocation6 + $0xa4] sm:$0xf]
    %v281 = vld [vmem:[#allocation6 + $0xa8] sm:$0xf]
    %v282 = vld [vmem:[#allocation6 + $0xac] sm:$0xf]
    %v283 = vld [vmem:[#allocation6 + $0xb0] sm:$0xf]
    %v284 = vld [vmem:[#allocation6 + $0xb4] sm:$0xf]
    %v285 = vld [vmem:[#allocation6 + $0xb8] sm:$0xf]
    %v286 = vld [vmem:[#allocation6 + $0xbc] sm:$0xf]
    %v287 = vld [vmem:[%s150 + $0x7] sm:$0xff]
    %v288 = vld [vmem:[%s150 + $0x1f] sm:$0xff]
    %v289 = vld [vmem:[%s150 + $0x37] sm:$0xff]
    %v290 = vld [vmem:[%s150 + $0x4f] sm:$0xff]
    %v291 = vld [vmem:[%s150 + $0x67] sm:$0xff]
    %v292 = vld [vmem:[%s150 + $0x7f] sm:$0xff]
    %v293 = vld [vmem:[%s150 + $0x97] sm:$0xff]
    %v294 = vld [vmem:[%s150 + $0xaf] sm:$0xff]
    %v295 = vld [vmem:[%s150 + $0xf7] sm:$0xff]
    %v296 = vld [vmem:[%s150 + $0x10f] sm:$0xff]
    %v297 = vld [vmem:[%s150 + $0x127] sm:$0xff]
    %v298 = vld [vmem:[%s150 + $0x13f] sm:$0xff]
    %v299 = vld [vmem:[%s150 + $0x157] sm:$0xff]
    %v300 = vld [vmem:[%s150 + $0x16f] sm:$0xff]
    %v301 = vld [vmem:[%s150 + $0x187] sm:$0xff]
    %v302 = vld [vmem:[%s150 + $0x19f] sm:$0xff]
    %v303 = vld [vmem:[%s150 + $0x8] sm:$0xff]
    %v304 = vld [vmem:[%s150 + $0x20] sm:$0xff]
    %v305 = vld [vmem:[%s150 + $0x38] sm:$0xff]
    %v306 = vld [vmem:[%s150 + $0x50] sm:$0xff]
    %v307 = vld [vmem:[%s150 + $0x68] sm:$0xff]
    %v308 = vld [vmem:[%s150 + $0x80] sm:$0xff]
    %v309 = vld [vmem:[%s150 + $0x98] sm:$0xff]
    %v310 = vld [vmem:[%s150 + $0xb0] sm:$0xff]
    %v311 = vld [vmem:[%s150 + $0xf8] sm:$0xff]
    %v312 = vld [vmem:[%s150 + $0x110] sm:$0xff]
    %v313 = vld [vmem:[%s150 + $0x128] sm:$0xff]
    %v314 = vld [vmem:[%s150 + $0x140] sm:$0xff]
    %v315 = vld [vmem:[%s150 + $0x158] sm:$0xff]
    %v316 = vld [vmem:[%s150 + $0x170] sm:$0xff]
    %v317 = vld [vmem:[%s150 + $0x188] sm:$0xff]
    %v318 = vld [vmem:[%s150 + $0x1a0] sm:$0xff]
    %v319 = vld [vmem:[%s150 + $0x9] sm:$0xff]
    %v320 = vld [vmem:[%s150 + $0x21] sm:$0xff]
    %v321 = vld [vmem:[%s150 + $0x39] sm:$0xff]
    %v322 = vld [vmem:[%s150 + $0x51] sm:$0xff]
    %v323 = vld [vmem:[%s150 + $0x69] sm:$0xff]
    %v324 = vld [vmem:[%s150 + $0x81] sm:$0xff]
    %v325 = vld [vmem:[%s150 + $0x99] sm:$0xff]
    %v326 = vld [vmem:[%s150 + $0xb1] sm:$0xff]
    %v327 = vld [vmem:[%s150 + $0xf9] sm:$0xff]
    %v328 = vld [vmem:[%s150 + $0x111] sm:$0xff]
    %v329 = vld [vmem:[%s150 + $0x129] sm:$0xff]
    %v330 = vld [vmem:[%s150 + $0x141] sm:$0xff]
    %v331 = vld [vmem:[%s150 + $0x159] sm:$0xff]
    %v332 = vld [vmem:[%s150 + $0x171] sm:$0xff]
    %v333 = vld [vmem:[%s150 + $0x189] sm:$0xff]
    %v334 = vld [vmem:[%s150 + $0x1a1] sm:$0xff]
    %v335 = vpack.c.bf16 %v288, %v287
    %v336 = vpack.c.bf16 %v304, %v303
    %v337 = vpack.c.bf16 %v320, %v319
    %v338 = vpack.c.bf16 %v290, %v289
    %v339 = vpack.c.bf16 %v306, %v305
    %v340 = vpack.c.bf16 %v322, %v321
    %v341 = vpack.c.bf16 %v292, %v291
    %v342 = vpack.c.bf16 %v308, %v307
    %v343 = vpack.c.bf16 %v324, %v323
    %v344 = vpack.c.bf16 %v294, %v293
    %v345 = vpack.c.bf16 %v310, %v309
    %v346 = vpack.c.bf16 %v326, %v325
    %v347 = vpack.c.bf16 %v296, %v295
    %v348 = vpack.c.bf16 %v312, %v311
    %v349 = vpack.c.bf16 %v328, %v327
    %v350 = vpack.c.bf16 %v298, %v297
    %v351 = vpack.c.bf16 %v314, %v313
    %v352 = vpack.c.bf16 %v330, %v329
    %v353 = vpack.c.bf16 %v300, %v299
    %v354 = vpack.c.bf16 %v316, %v315
    %v355 = vpack.c.bf16 %v332, %v331
    %v356 = vpack.c.bf16 %v302, %v301
    %v357 = vpack.c.bf16 %v318, %v317
    %v358 = vpack.c.bf16 %v334, %v333
    %s359 = scalar_lea.vmem [#allocation6], 192
    %v360 = vld [vmem:[%s359] sm:$0xf]
    %v361 = vld [vmem:[%s359 + $0x4] sm:$0xf]
    %v362 = vld [vmem:[%s359 + $0x8] sm:$0xf]
    %v363 = vld [vmem:[%s359 + $0xc] sm:$0xf]
    %v364 = vld [vmem:[%s359 + $0x10] sm:$0xf]
    %v365 = vld [vmem:[%s359 + $0x14] sm:$0xf]
    %v366 = vld [vmem:[%s359 + $0x18] sm:$0xf]
    %v367 = vld [vmem:[%s359 + $0x1c] sm:$0xf]
    %v368 = vld [vmem:[%s359 + $0x20] sm:$0xf]
    %v369 = vld [vmem:[%s359 + $0x24] sm:$0xf]
    %v370 = vld [vmem:[%s359 + $0x28] sm:$0xf]
    %v371 = vld [vmem:[%s359 + $0x2c] sm:$0xf]
    %v372 = vld [vmem:[%s359 + $0x30] sm:$0xf]
    %v373 = vld [vmem:[%s359 + $0x34] sm:$0xf]
    %v374 = vld [vmem:[%s359 + $0x38] sm:$0xf]
    %v375 = vld [vmem:[%s359 + $0x3c] sm:$0xf]
    %v376 = vld [vmem:[%s359 + $0x40] sm:$0xf]
    %v377 = vld [vmem:[%s359 + $0x44] sm:$0xf]
    %v378 = vld [vmem:[%s359 + $0x48] sm:$0xf]
    %v379 = vld [vmem:[%s359 + $0x4c] sm:$0xf]
    %v380 = vld [vmem:[%s359 + $0x50] sm:$0xf]
    %v381 = vld [vmem:[%s359 + $0x54] sm:$0xf]
    %v382 = vld [vmem:[%s359 + $0x58] sm:$0xf]
    %v383 = vld [vmem:[%s359 + $0x5c] sm:$0xf]
    %v384 = vld [vmem:[%s359 + $0x60] sm:$0xf]
    %v385 = vld [vmem:[%s359 + $0x64] sm:$0xf]
    %v386 = vld [vmem:[%s359 + $0x68] sm:$0xf]
    %v387 = vld [vmem:[%s359 + $0x6c] sm:$0xf]
    %v388 = vld [vmem:[%s359 + $0x70] sm:$0xf]
    %v389 = vld [vmem:[%s359 + $0x74] sm:$0xf]
    %v390 = vld [vmem:[%s359 + $0x78] sm:$0xf]
    %v391 = vld [vmem:[%s359 + $0x7c] sm:$0xf]
    %v392 = vld [vmem:[%s359 + $0x80] sm:$0xf]
    %v393 = vld [vmem:[%s359 + $0x84] sm:$0xf]
    %v394 = vld [vmem:[%s359 + $0x88] sm:$0xf]
    %v395 = vld [vmem:[%s359 + $0x8c] sm:$0xf]
    %v396 = vld [vmem:[%s359 + $0x90] sm:$0xf]
    %v397 = vld [vmem:[%s359 + $0x94] sm:$0xf]
    %v398 = vld [vmem:[%s359 + $0x98] sm:$0xf]
    %v399 = vld [vmem:[%s359 + $0x9c] sm:$0xf]
    %v400 = vld [vmem:[%s359 + $0xa0] sm:$0xf]
    %v401 = vld [vmem:[%s359 + $0xa4] sm:$0xf]
    %v402 = vld [vmem:[%s359 + $0xa8] sm:$0xf]
    %v403 = vld [vmem:[%s359 + $0xac] sm:$0xf]
    %v404 = vld [vmem:[%s359 + $0xb0] sm:$0xf]
    %v405 = vld [vmem:[%s359 + $0xb4] sm:$0xf]
    %v406 = vld [vmem:[%s359 + $0xb8] sm:$0xf]
    %v407 = vld [vmem:[%s359 + $0xbc] sm:$0xf]
    %v456 = vunpack.c.l.b16 %v360
    %v457 = vunpack.c.l.b16 %v361
    %v458 = vunpack.c.l.b16 %v362
    %v459 = vunpack.c.l.b16 %v363
    %v460 = vunpack.c.l.b16 %v364
    %v461 = vunpack.c.l.b16 %v365
    %v462 = vunpack.c.l.b16 %v366
    %v463 = vunpack.c.l.b16 %v367
    %v464 = vunpack.c.l.b16 %v368
    %v465 = vunpack.c.l.b16 %v369
    %v466 = vunpack.c.l.b16 %v370
    %v467 = vunpack.c.l.b16 %v371
    %v468 = vunpack.c.l.b16 %v372
    %v469 = vunpack.c.l.b16 %v373
    %v470 = vunpack.c.l.b16 %v374
    %v471 = vunpack.c.l.b16 %v375
    %v472 = vunpack.c.l.b16 %v376
    %v473 = vunpack.c.l.b16 %v377
    %v474 = vunpack.c.l.b16 %v378
    %v475 = vunpack.c.l.b16 %v379
    %v476 = vunpack.c.l.b16 %v380
    %v477 = vunpack.c.l.b16 %v381
    %v478 = vunpack.c.l.b16 %v382
    %v479 = vunpack.c.l.b16 %v383
    %v480 = vunpack.c.l.b16 %v384
    %v481 = vunpack.c.l.b16 %v385
    %v482 = vunpack.c.l.b16 %v386
    %v483 = vunpack.c.l.b16 %v387
    %v484 = vunpack.c.l.b16 %v388
    %v485 = vunpack.c.l.b16 %v389
    %v486 = vunpack.c.l.b16 %v390
    %v487 = vunpack.c.l.b16 %v391
    %v488 = vunpack.c.l.b16 %v392
    %v489 = vunpack.c.l.b16 %v393
    %v490 = vunpack.c.l.b16 %v394
    %v491 = vunpack.c.l.b16 %v395
    %v492 = vunpack.c.l.b16 %v396
    %v493 = vunpack.c.l.b16 %v397
    %v494 = vunpack.c.l.b16 %v398
    %v495 = vunpack.c.l.b16 %v399
    %v496 = vunpack.c.l.b16 %v400
    %v497 = vunpack.c.l.b16 %v401
    %v498 = vunpack.c.l.b16 %v402
    %v499 = vunpack.c.l.b16 %v403
    %v500 = vunpack.c.l.b16 %v404
    %v501 = vunpack.c.l.b16 %v405
    %v502 = vunpack.c.l.b16 %v406
    %v503 = vunpack.c.l.b16 %v407
    %v504 = vpack.c.b16 %v457, %v456
    %v505 = vpack.c.b16 %v459, %v458
    %v506 = vpack.c.b16 %v461, %v460
    %v507 = vpack.c.b16 %v463, %v462
    %v508 = vpack.c.b16 %v465, %v464
    %v509 = vpack.c.b16 %v467, %v466
    %v510 = vpack.c.b16 %v469, %v468
    %v511 = vpack.c.b16 %v471, %v470
    %v512 = vpack.c.b16 %v473, %v472
    %v513 = vpack.c.b16 %v475, %v474
    %v514 = vpack.c.b16 %v477, %v476
    %v515 = vpack.c.b16 %v479, %v478
    %v516 = vpack.c.b16 %v481, %v480
    %v517 = vpack.c.b16 %v483, %v482
    %v518 = vpack.c.b16 %v485, %v484
    %v519 = vpack.c.b16 %v487, %v486
    %v520 = vpack.c.b16 %v489, %v488
    %v521 = vpack.c.b16 %v491, %v490
    %v522 = vpack.c.b16 %v493, %v492
    %v523 = vpack.c.b16 %v495, %v494
    %v524 = vpack.c.b16 %v497, %v496
    %v525 = vpack.c.b16 %v499, %v498
    %v526 = vpack.c.b16 %v501, %v500
    %v527 = vpack.c.b16 %v503, %v502
    %552 = vmatpush.bf16.msra.mxu0 %v511
    %553 = vmatpush.bf16.msra.mxu0 %v510
    %554 = vmatpush.bf16.msra.mxu0 %v509
    %555 = vmatpush.bf16.msra.mxu0 %v508
    %556 = vmatpush.bf16.msra.mxu0 %v507
    %557 = vmatpush.bf16.msra.mxu0 %v506
    %558 = vmatpush.bf16.msra.mxu0 %v505
    %559 = vmatpush.bf16.msra.mxu0 %v504
    %560 = vmatmul.bf16.gmra.mxu0 %v335
    %v561 = vpop.f32.mrf.mxu0
    %v562 = vadd.f32 0.0, %v561
    %v563 = vpop.f32.mrf.mxu0
    %v564 = vadd.f32 0.0, %v563
    %565 = vmatmul.bf16.gmra.mxu0 %v338
    %v566 = vpop.f32.mrf.mxu0
    %v567 = vadd.f32 0.0, %v566
    %v568 = vpop.f32.mrf.mxu0
    %v569 = vadd.f32 0.0, %v568
    %570 = vmatmul.bf16.gmra.mxu0 %v341
    %v571 = vpop.f32.mrf.mxu0
    %v572 = vadd.f32 0.0, %v571
    %v573 = vpop.f32.mrf.mxu0
    %v574 = vadd.f32 0.0, %v573
    %575 = vmatmul.bf16.gmra.mxu0 %v344
    %v576 = vpop.f32.mrf.mxu0
    %v577 = vadd.f32 0.0, %v576
    %v578 = vpop.f32.mrf.mxu0
    %v579 = vadd.f32 0.0, %v578
    %580 = vmatmul.bf16.gmra.mxu0 %v347
    %v581 = vpop.f32.mrf.mxu0
    %v582 = vadd.f32 0.0, %v581
    %v583 = vpop.f32.mrf.mxu0
    %v584 = vadd.f32 0.0, %v583
    %585 = vmatmul.bf16.gmra.mxu0 %v350
    %v586 = vpop.f32.mrf.mxu0
    %v587 = vadd.f32 0.0, %v586
    %v588 = vpop.f32.mrf.mxu0
    %v589 = vadd.f32 0.0, %v588
    %590 = vmatmul.bf16.gmra.mxu0 %v353
    %v591 = vpop.f32.mrf.mxu0
    %v592 = vadd.f32 0.0, %v591
    %v593 = vpop.f32.mrf.mxu0
    %v594 = vadd.f32 0.0, %v593
    %595 = vmatmul.bf16.gmra.mxu0 %v356
    %v596 = vpop.f32.mrf.mxu0
    %v597 = vadd.f32 0.0, %v596
    %v598 = vpop.f32.mrf.mxu0
    %v599 = vadd.f32 0.0, %v598
    %600 = vdwg.mxu0
    %601 = vmatpush.bf16.msra.mxu0 %v519
    %602 = vmatpush.bf16.msra.mxu0 %v518
    %603 = vmatpush.bf16.msra.mxu0 %v517
    %604 = vmatpush.bf16.msra.mxu0 %v516
    %605 = vmatpush.bf16.msra.mxu0 %v515
    %606 = vmatpush.bf16.msra.mxu0 %v514
    %607 = vmatpush.bf16.msra.mxu0 %v513
    %608 = vmatpush.bf16.msra.mxu0 %v512
    %609 = vmatmul.bf16.gmra.mxu0 %v336
    %v610 = vpop.f32.mrf.mxu0
    %v611 = vadd.f32 %v562, %v610
    %v612 = vpop.f32.mrf.mxu0
    %v613 = vadd.f32 %v564, %v612
    %614 = vmatmul.bf16.gmra.mxu0 %v339
    %v615 = vpop.f32.mrf.mxu0
    %v616 = vadd.f32 %v567, %v615
    %v617 = vpop.f32.mrf.mxu0
    %v618 = vadd.f32 %v569, %v617
    %619 = vmatmul.bf16.gmra.mxu0 %v342
    %v620 = vpop.f32.mrf.mxu0
    %v621 = vadd.f32 %v572, %v620
    %v622 = vpop.f32.mrf.mxu0
    %v623 = vadd.f32 %v574, %v622
    %624 = vmatmul.bf16.gmra.mxu0 %v345
    %v625 = vpop.f32.mrf.mxu0
    %v626 = vadd.f32 %v577, %v625
    %v627 = vpop.f32.mrf.mxu0
    %v628 = vadd.f32 %v579, %v627
    %629 = vmatmul.bf16.gmra.mxu0 %v348
    %v630 = vpop.f32.mrf.mxu0
    %v631 = vadd.f32 %v582, %v630
    %v632 = vpop.f32.mrf.mxu0
    %v633 = vadd.f32 %v584, %v632
    %634 = vmatmul.bf16.gmra.mxu0 %v351
    %v635 = vpop.f32.mrf.mxu0
    %v636 = vadd.f32 %v587, %v635
    %v637 = vpop.f32.mrf.mxu0
    %v638 = vadd.f32 %v589, %v637
    %639 = vmatmul.bf16.gmra.mxu0 %v354
    %v640 = vpop.f32.mrf.mxu0
    %v641 = vadd.f32 %v592, %v640
    %v642 = vpop.f32.mrf.mxu0
    %v643 = vadd.f32 %v594, %v642
    %644 = vmatmul.bf16.gmra.mxu0 %v357
    %v645 = vpop.f32.mrf.mxu0
    %v646 = vadd.f32 %v597, %v645
    %v647 = vpop.f32.mrf.mxu0
    %v648 = vadd.f32 %v599, %v647
    %649 = vdwg.mxu0
    %650 = vmatpush.bf16.msra.mxu0 %v527
    %651 = vmatpush.bf16.msra.mxu0 %v526
    %652 = vmatpush.bf16.msra.mxu0 %v525
    %653 = vmatpush.bf16.msra.mxu0 %v524
    %654 = vmatpush.bf16.msra.mxu0 %v523
    %655 = vmatpush.bf16.msra.mxu0 %v522
    %656 = vmatpush.bf16.msra.mxu0 %v521
    %657 = vmatpush.bf16.msra.mxu0 %v520
    %658 = vmatmul.bf16.gmra.mxu0 %v337
    %v659 = vpop.f32.mrf.mxu0
    %v660 = vadd.f32 %v611, %v659
    %v661 = vpop.f32.mrf.mxu0
    %v662 = vadd.f32 %v613, %v661
    %663 = vmatmul.bf16.gmra.mxu0 %v340
    %v664 = vpop.f32.mrf.mxu0
    %v665 = vadd.f32 %v616, %v664
    %v666 = vpop.f32.mrf.mxu0
    %v667 = vadd.f32 %v618, %v666
    %668 = vmatmul.bf16.gmra.mxu0 %v343
    %v669 = vpop.f32.mrf.mxu0
    %v670 = vadd.f32 %v621, %v669
    %v671 = vpop.f32.mrf.mxu0
    %v672 = vadd.f32 %v623, %v671
    %673 = vmatmul.bf16.gmra.mxu0 %v346
    %v674 = vpop.f32.mrf.mxu0
    %v675 = vadd.f32 %v626, %v674
    %v676 = vpop.f32.mrf.mxu0
    %v677 = vadd.f32 %v628, %v676
    %678 = vmatmul.bf16.gmra.mxu0 %v349
    %v679 = vpop.f32.mrf.mxu0
    %v680 = vadd.f32 %v631, %v679
    %v681 = vpop.f32.mrf.mxu0
    %v682 = vadd.f32 %v633, %v681
    %683 = vmatmul.bf16.gmra.mxu0 %v352
    %v684 = vpop.f32.mrf.mxu0
    %v685 = vadd.f32 %v636, %v684
    %v686 = vpop.f32.mrf.mxu0
    %v687 = vadd.f32 %v638, %v686
    %688 = vmatmul.bf16.gmra.mxu0 %v355
    %v689 = vpop.f32.mrf.mxu0
    %v690 = vadd.f32 %v641, %v689
    %v691 = vpop.f32.mrf.mxu0
    %v692 = vadd.f32 %v643, %v691
    %693 = vmatmul.bf16.gmra.mxu0 %v358
    %v694 = vpop.f32.mrf.mxu0
    %v695 = vadd.f32 %v646, %v694
    %v696 = vpop.f32.mrf.mxu0
    %v697 = vadd.f32 %v648, %v696
    %698 = vdwg.mxu0
    %v747 = vunpack.c.l.b16 %v239
    %v748 = vunpack.c.l.b16 %v240
    %v749 = vunpack.c.l.b16 %v241
    %v750 = vunpack.c.l.b16 %v242
    %v751 = vunpack.c.l.b16 %v243
    %v752 = vunpack.c.l.b16 %v244
    %v753 = vunpack.c.l.b16 %v245
    %v754 = vunpack.c.l.b16 %v246
    %v755 = vunpack.c.l.b16 %v247
    %v756 = vunpack.c.l.b16 %v248
    %v757 = vunpack.c.l.b16 %v249
    %v758 = vunpack.c.l.b16 %v250
    %v759 = vunpack.c.l.b16 %v251
    %v760 = vunpack.c.l.b16 %v252
    %v761 = vunpack.c.l.b16 %v253
    %v762 = vunpack.c.l.b16 %v254
    %v763 = vunpack.c.l.b16 %v255
    %v764 = vunpack.c.l.b16 %v256
    %v765 = vunpack.c.l.b16 %v257
    %v766 = vunpack.c.l.b16 %v258
    %v767 = vunpack.c.l.b16 %v259
    %v768 = vunpack.c.l.b16 %v260
    %v769 = vunpack.c.l.b16 %v261
    %v770 = vunpack.c.l.b16 %v262
    %v771 = vunpack.c.l.b16 %v263
    %v772 = vunpack.c.l.b16 %v264
    %v773 = vunpack.c.l.b16 %v265
    %v774 = vunpack.c.l.b16 %v266
    %v775 = vunpack.c.l.b16 %v267
    %v776 = vunpack.c.l.b16 %v268
    %v777 = vunpack.c.l.b16 %v269
    %v778 = vunpack.c.l.b16 %v270
    %v779 = vunpack.c.l.b16 %v271
    %v780 = vunpack.c.l.b16 %v272
    %v781 = vunpack.c.l.b16 %v273
    %v782 = vunpack.c.l.b16 %v274
    %v783 = vunpack.c.l.b16 %v275
    %v784 = vunpack.c.l.b16 %v276
    %v785 = vunpack.c.l.b16 %v277
    %v786 = vunpack.c.l.b16 %v278
    %v787 = vunpack.c.l.b16 %v279
    %v788 = vunpack.c.l.b16 %v280
    %v789 = vunpack.c.l.b16 %v281
    %v790 = vunpack.c.l.b16 %v282
    %v791 = vunpack.c.l.b16 %v283
    %v792 = vunpack.c.l.b16 %v284
    %v793 = vunpack.c.l.b16 %v285
    %v794 = vunpack.c.l.b16 %v286
    %v795 = vpack.c.b16 %v748, %v747
    %v796 = vpack.c.b16 %v750, %v749
    %v797 = vpack.c.b16 %v752, %v751
    %v798 = vpack.c.b16 %v754, %v753
    %v799 = vpack.c.b16 %v756, %v755
    %v800 = vpack.c.b16 %v758, %v757
    %v801 = vpack.c.b16 %v760, %v759
    %v802 = vpack.c.b16 %v762, %v761
    %v803 = vpack.c.b16 %v764, %v763
    %v804 = vpack.c.b16 %v766, %v765
    %v805 = vpack.c.b16 %v768, %v767
    %v806 = vpack.c.b16 %v770, %v769
    %v807 = vpack.c.b16 %v772, %v771
    %v808 = vpack.c.b16 %v774, %v773
    %v809 = vpack.c.b16 %v776, %v775
    %v810 = vpack.c.b16 %v778, %v777
    %v811 = vpack.c.b16 %v780, %v779
    %v812 = vpack.c.b16 %v782, %v781
    %v813 = vpack.c.b16 %v784, %v783
    %v814 = vpack.c.b16 %v786, %v785
    %v815 = vpack.c.b16 %v788, %v787
    %v816 = vpack.c.b16 %v790, %v789
    %v817 = vpack.c.b16 %v792, %v791
    %v818 = vpack.c.b16 %v794, %v793
    %843 = vmatpush.bf16.msra.mxu0 %v802
    %844 = vmatpush.bf16.msra.mxu0 %v801
    %845 = vmatpush.bf16.msra.mxu0 %v800
    %846 = vmatpush.bf16.msra.mxu0 %v799
    %847 = vmatpush.bf16.msra.mxu0 %v798
    %848 = vmatpush.bf16.msra.mxu0 %v797
    %849 = vmatpush.bf16.msra.mxu0 %v796
    %850 = vmatpush.bf16.msra.mxu0 %v795
    %851 = vmatmul.bf16.gmra.mxu0 %v215
    %v852 = vpop.f32.mrf.mxu0
    %v853 = vadd.f32 %v660, %v852
    %v854 = vpop.f32.mrf.mxu0
    %v855 = vadd.f32 %v662, %v854
    %856 = vmatmul.bf16.gmra.mxu0 %v218
    %v857 = vpop.f32.mrf.mxu0
    %v858 = vadd.f32 %v665, %v857
    %v859 = vpop.f32.mrf.mxu0
    %v860 = vadd.f32 %v667, %v859
    %861 = vmatmul.bf16.gmra.mxu0 %v221
    %v862 = vpop.f32.mrf.mxu0
    %v863 = vadd.f32 %v670, %v862
    %v864 = vpop.f32.mrf.mxu0
    %v865 = vadd.f32 %v672, %v864
    %866 = vmatmul.bf16.gmra.mxu0 %v224
    %v867 = vpop.f32.mrf.mxu0
    %v868 = vadd.f32 %v675, %v867
    %v869 = vpop.f32.mrf.mxu0
    %v870 = vadd.f32 %v677, %v869
    %871 = vmatmul.bf16.gmra.mxu0 %v227
    %v872 = vpop.f32.mrf.mxu0
    %v873 = vadd.f32 %v680, %v872
    %v874 = vpop.f32.mrf.mxu0
    %v875 = vadd.f32 %v682, %v874
    %876 = vmatmul.bf16.gmra.mxu0 %v230
    %v877 = vpop.f32.mrf.mxu0
    %v878 = vadd.f32 %v685, %v877
    %v879 = vpop.f32.mrf.mxu0
    %v880 = vadd.f32 %v687, %v879
    %881 = vmatmul.bf16.gmra.mxu0 %v233
    %v882 = vpop.f32.mrf.mxu0
    %v883 = vadd.f32 %v690, %v882
    %v884 = vpop.f32.mrf.mxu0
    %v885 = vadd.f32 %v692, %v884
    %886 = vmatmul.bf16.gmra.mxu0 %v236
    %v887 = vpop.f32.mrf.mxu0
    %v888 = vadd.f32 %v695, %v887
    %v889 = vpop.f32.mrf.mxu0
    %v890 = vadd.f32 %v697, %v889
    %891 = vdwg.mxu0
    %892 = vmatpush.bf16.msra.mxu0 %v810
    %893 = vmatpush.bf16.msra.mxu0 %v809
    %894 = vmatpush.bf16.msra.mxu0 %v808
    %895 = vmatpush.bf16.msra.mxu0 %v807
    %896 = vmatpush.bf16.msra.mxu0 %v806
    %897 = vmatpush.bf16.msra.mxu0 %v805
    %898 = vmatpush.bf16.msra.mxu0 %v804
    %899 = vmatpush.bf16.msra.mxu0 %v803
    %900 = vmatmul.bf16.gmra.mxu0 %v216
    %v901 = vpop.f32.mrf.mxu0
    %v902 = vadd.f32 %v853, %v901
    %v903 = vpop.f32.mrf.mxu0
    %v904 = vadd.f32 %v855, %v903
    %905 = vmatmul.bf16.gmra.mxu0 %v219
    %v906 = vpop.f32.mrf.mxu0
    %v907 = vadd.f32 %v858, %v906
    %v908 = vpop.f32.mrf.mxu0
    %v909 = vadd.f32 %v860, %v908
    %910 = vmatmul.bf16.gmra.mxu0 %v222
    %v911 = vpop.f32.mrf.mxu0
    %v912 = vadd.f32 %v863, %v911
    %v913 = vpop.f32.mrf.mxu0
    %v914 = vadd.f32 %v865, %v913
    %915 = vmatmul.bf16.gmra.mxu0 %v225
    %v916 = vpop.f32.mrf.mxu0
    %v917 = vadd.f32 %v868, %v916
    %v918 = vpop.f32.mrf.mxu0
    %v919 = vadd.f32 %v870, %v918
    %920 = vmatmul.bf16.gmra.mxu0 %v228
    %v921 = vpop.f32.mrf.mxu0
    %v922 = vadd.f32 %v873, %v921
    %v923 = vpop.f32.mrf.mxu0
    %v924 = vadd.f32 %v875, %v923
    %925 = vmatmul.bf16.gmra.mxu0 %v231
    %v926 = vpop.f32.mrf.mxu0
    %v927 = vadd.f32 %v878, %v926
    %v928 = vpop.f32.mrf.mxu0
    %v929 = vadd.f32 %v880, %v928
    %930 = vmatmul.bf16.gmra.mxu0 %v234
    %v931 = vpop.f32.mrf.mxu0
    %v932 = vadd.f32 %v883, %v931
    %v933 = vpop.f32.mrf.mxu0
    %v934 = vadd.f32 %v885, %v933
    %935 = vmatmul.bf16.gmra.mxu0 %v237
    %v936 = vpop.f32.mrf.mxu0
    %v937 = vadd.f32 %v888, %v936
    %v938 = vpop.f32.mrf.mxu0
    %v939 = vadd.f32 %v890, %v938
    %940 = vdwg.mxu0
    %941 = vmatpush.bf16.msra.mxu0 %v818
    %942 = vmatpush.bf16.msra.mxu0 %v817
    %943 = vmatpush.bf16.msra.mxu0 %v816
    %944 = vmatpush.bf16.msra.mxu0 %v815
    %945 = vmatpush.bf16.msra.mxu0 %v814
    %946 = vmatpush.bf16.msra.mxu0 %v813
    %947 = vmatpush.bf16.msra.mxu0 %v812
    %948 = vmatpush.bf16.msra.mxu0 %v811
    %949 = vmatmul.bf16.gmra.mxu0 %v217
    %v950 = vpop.f32.mrf.mxu0
    %v951 = vadd.f32 %v902, %v950
    %v952 = vpop.f32.mrf.mxu0
    %v953 = vadd.f32 %v904, %v952
    %954 = vmatmul.bf16.gmra.mxu0 %v220
    %v955 = vpop.f32.mrf.mxu0
    %v956 = vadd.f32 %v907, %v955
    %v957 = vpop.f32.mrf.mxu0
    %v958 = vadd.f32 %v909, %v957
    %959 = vmatmul.bf16.gmra.mxu0 %v223
    %v960 = vpop.f32.mrf.mxu0
    %v961 = vadd.f32 %v912, %v960
    %v962 = vpop.f32.mrf.mxu0
    %v963 = vadd.f32 %v914, %v962
    %964 = vmatmul.bf16.gmra.mxu0 %v226
    %v965 = vpop.f32.mrf.mxu0
    %v966 = vadd.f32 %v917, %v965
    %v967 = vpop.f32.mrf.mxu0
    %v968 = vadd.f32 %v919, %v967
    %969 = vmatmul.bf16.gmra.mxu0 %v229
    %v970 = vpop.f32.mrf.mxu0
    %v971 = vadd.f32 %v922, %v970
    %v972 = vpop.f32.mrf.mxu0
    %v973 = vadd.f32 %v924, %v972
    %974 = vmatmul.bf16.gmra.mxu0 %v232
    %v975 = vpop.f32.mrf.mxu0
    %v976 = vadd.f32 %v927, %v975
    %v977 = vpop.f32.mrf.mxu0
    %v978 = vadd.f32 %v929, %v977
    %979 = vmatmul.bf16.gmra.mxu0 %v235
    %v980 = vpop.f32.mrf.mxu0
    %v981 = vadd.f32 %v932, %v980
    %v982 = vpop.f32.mrf.mxu0
    %v983 = vadd.f32 %v934, %v982
    %984 = vmatmul.bf16.gmra.mxu0 %v238
    %v985 = vpop.f32.mrf.mxu0
    %v986 = vadd.f32 %v937, %v985
    %v987 = vpop.f32.mrf.mxu0
    %v988 = vadd.f32 %v939, %v987
    %989 = vdwg.mxu0
    %s990 = scalar_lea.vmem [#allocation2], 48
    %v991 = vld [vmem:[%s990 + $0x7] sm:$0xff]
    %v992 = vld [vmem:[%s990 + $0x1f] sm:$0xff]
    %v993 = vld [vmem:[%s990 + $0x37] sm:$0xff]
    %v994 = vld [vmem:[%s990 + $0x4f] sm:$0xff]
    %v995 = vld [vmem:[%s990 + $0x67] sm:$0xff]
    %v996 = vld [vmem:[%s990 + $0x7f] sm:$0xff]
    %v997 = vld [vmem:[%s990 + $0x97] sm:$0xff]
    %v998 = vld [vmem:[%s990 + $0xaf] sm:$0xff]
    %v999 = vld [vmem:[%s990 + $0xf7] sm:$0xff]
    %v1000 = vld [vmem:[%s990 + $0x10f] sm:$0xff]
    %v1001 = vld [vmem:[%s990 + $0x127] sm:$0xff]
    %v1002 = vld [vmem:[%s990 + $0x13f] sm:$0xff]
    %v1003 = vld [vmem:[%s990 + $0x157] sm:$0xff]
    %v1004 = vld [vmem:[%s990 + $0x16f] sm:$0xff]
    %v1005 = vld [vmem:[%s990 + $0x187] sm:$0xff]
    %v1006 = vld [vmem:[%s990 + $0x19f] sm:$0xff]
    %v1007 = vld [vmem:[%s990 + $0x8] sm:$0xff]
    %v1008 = vld [vmem:[%s990 + $0x20] sm:$0xff]
    %v1009 = vld [vmem:[%s990 + $0x38] sm:$0xff]
    %v1010 = vld [vmem:[%s990 + $0x50] sm:$0xff]
    %v1011 = vld [vmem:[%s990 + $0x68] sm:$0xff]
    %v1012 = vld [vmem:[%s990 + $0x80] sm:$0xff]
    %v1013 = vld [vmem:[%s990 + $0x98] sm:$0xff]
    %v1014 = vld [vmem:[%s990 + $0xb0] sm:$0xff]
    %v1015 = vld [vmem:[%s990 + $0xf8] sm:$0xff]
    %v1016 = vld [vmem:[%s990 + $0x110] sm:$0xff]
    %v1017 = vld [vmem:[%s990 + $0x128] sm:$0xff]
    %v1018 = vld [vmem:[%s990 + $0x140] sm:$0xff]
    %v1019 = vld [vmem:[%s990 + $0x158] sm:$0xff]
    %v1020 = vld [vmem:[%s990 + $0x170] sm:$0xff]
    %v1021 = vld [vmem:[%s990 + $0x188] sm:$0xff]
    %v1022 = vld [vmem:[%s990 + $0x1a0] sm:$0xff]
    %v1023 = vld [vmem:[%s990 + $0x9] sm:$0xff]
    %v1024 = vld [vmem:[%s990 + $0x21] sm:$0xff]
    %v1025 = vld [vmem:[%s990 + $0x39] sm:$0xff]
    %v1026 = vld [vmem:[%s990 + $0x51] sm:$0xff]
    %v1027 = vld [vmem:[%s990 + $0x69] sm:$0xff]
    %v1028 = vld [vmem:[%s990 + $0x81] sm:$0xff]
    %v1029 = vld [vmem:[%s990 + $0x99] sm:$0xff]
    %v1030 = vld [vmem:[%s990 + $0xb1] sm:$0xff]
    %v1031 = vld [vmem:[%s990 + $0xf9] sm:$0xff]
    %v1032 = vld [vmem:[%s990 + $0x111] sm:$0xff]
    %v1033 = vld [vmem:[%s990 + $0x129] sm:$0xff]
    %v1034 = vld [vmem:[%s990 + $0x141] sm:$0xff]
    %v1035 = vld [vmem:[%s990 + $0x159] sm:$0xff]
    %v1036 = vld [vmem:[%s990 + $0x171] sm:$0xff]
    %v1037 = vld [vmem:[%s990 + $0x189] sm:$0xff]
    %v1038 = vld [vmem:[%s990 + $0x1a1] sm:$0xff]
    %v1039 = vpack.c.bf16 %v992, %v991
    %v1040 = vpack.c.bf16 %v1008, %v1007
    %v1041 = vpack.c.bf16 %v1024, %v1023
    %v1042 = vpack.c.bf16 %v994, %v993
    %v1043 = vpack.c.bf16 %v1010, %v1009
    %v1044 = vpack.c.bf16 %v1026, %v1025
    %v1045 = vpack.c.bf16 %v996, %v995
    %v1046 = vpack.c.bf16 %v1012, %v1011
    %v1047 = vpack.c.bf16 %v1028, %v1027
    %v1048 = vpack.c.bf16 %v998, %v997
    %v1049 = vpack.c.bf16 %v1014, %v1013
    %v1050 = vpack.c.bf16 %v1030, %v1029
    %v1051 = vpack.c.bf16 %v1000, %v999
    %v1052 = vpack.c.bf16 %v1016, %v1015
    %v1053 = vpack.c.bf16 %v1032, %v1031
    %v1054 = vpack.c.bf16 %v1002, %v1001
    %v1055 = vpack.c.bf16 %v1018, %v1017
    %v1056 = vpack.c.bf16 %v1034, %v1033
    %v1057 = vpack.c.bf16 %v1004, %v1003
    %v1058 = vpack.c.bf16 %v1020, %v1019
    %v1059 = vpack.c.bf16 %v1036, %v1035
    %v1060 = vpack.c.bf16 %v1006, %v1005
    %v1061 = vpack.c.bf16 %v1022, %v1021
    %v1062 = vpack.c.bf16 %v1038, %v1037
    %s1063 = scalar_lea.vmem [#allocation6], 384
    %v1064 = vld [vmem:[%s1063] sm:$0xf]
    %v1065 = vld [vmem:[%s1063 + $0x4] sm:$0xf]
    %v1066 = vld [vmem:[%s1063 + $0x8] sm:$0xf]
    %v1067 = vld [vmem:[%s1063 + $0xc] sm:$0xf]
    %v1068 = vld [vmem:[%s1063 + $0x10] sm:$0xf]
    %v1069 = vld [vmem:[%s1063 + $0x14] sm:$0xf]
    %v1070 = vld [vmem:[%s1063 + $0x18] sm:$0xf]
    %v1071 = vld [vmem:[%s1063 + $0x1c] sm:$0xf]
    %v1072 = vld [vmem:[%s1063 + $0x20] sm:$0xf]
    %v1073 = vld [vmem:[%s1063 + $0x24] sm:$0xf]
    %v1074 = vld [vmem:[%s1063 + $0x28] sm:$0xf]
    %v1075 = vld [vmem:[%s1063 + $0x2c] sm:$0xf]
    %v1076 = vld [vmem:[%s1063 + $0x30] sm:$0xf]
    %v1077 = vld [vmem:[%s1063 + $0x34] sm:$0xf]
    %v1078 = vld [vmem:[%s1063 + $0x38] sm:$0xf]
    %v1079 = vld [vmem:[%s1063 + $0x3c] sm:$0xf]
    %v1080 = vld [vmem:[%s1063 + $0x40] sm:$0xf]
    %v1081 = vld [vmem:[%s1063 + $0x44] sm:$0xf]
    %v1082 = vld [vmem:[%s1063 + $0x48] sm:$0xf]
    %v1083 = vld [vmem:[%s1063 + $0x4c] sm:$0xf]
    %v1084 = vld [vmem:[%s1063 + $0x50] sm:$0xf]
    %v1085 = vld [vmem:[%s1063 + $0x54] sm:$0xf]
    %v1086 = vld [vmem:[%s1063 + $0x58] sm:$0xf]
    %v1087 = vld [vmem:[%s1063 + $0x5c] sm:$0xf]
    %v1088 = vld [vmem:[%s1063 + $0x60] sm:$0xf]
    %v1089 = vld [vmem:[%s1063 + $0x64] sm:$0xf]
    %v1090 = vld [vmem:[%s1063 + $0x68] sm:$0xf]
    %v1091 = vld [vmem:[%s1063 + $0x6c] sm:$0xf]
    %v1092 = vld [vmem:[%s1063 + $0x70] sm:$0xf]
    %v1093 = vld [vmem:[%s1063 + $0x74] sm:$0xf]
    %v1094 = vld [vmem:[%s1063 + $0x78] sm:$0xf]
    %v1095 = vld [vmem:[%s1063 + $0x7c] sm:$0xf]
    %v1096 = vld [vmem:[%s1063 + $0x80] sm:$0xf]
    %v1097 = vld [vmem:[%s1063 + $0x84] sm:$0xf]
    %v1098 = vld [vmem:[%s1063 + $0x88] sm:$0xf]
    %v1099 = vld [vmem:[%s1063 + $0x8c] sm:$0xf]
    %v1100 = vld [vmem:[%s1063 + $0x90] sm:$0xf]
    %v1101 = vld [vmem:[%s1063 + $0x94] sm:$0xf]
    %v1102 = vld [vmem:[%s1063 + $0x98] sm:$0xf]
    %v1103 = vld [vmem:[%s1063 + $0x9c] sm:$0xf]
    %v1104 = vld [vmem:[%s1063 + $0xa0] sm:$0xf]
    %v1105 = vld [vmem:[%s1063 + $0xa4] sm:$0xf]
    %v1106 = vld [vmem:[%s1063 + $0xa8] sm:$0xf]
    %v1107 = vld [vmem:[%s1063 + $0xac] sm:$0xf]
    %v1108 = vld [vmem:[%s1063 + $0xb0] sm:$0xf]
    %v1109 = vld [vmem:[%s1063 + $0xb4] sm:$0xf]
    %v1110 = vld [vmem:[%s1063 + $0xb8] sm:$0xf]
    %v1111 = vld [vmem:[%s1063 + $0xbc] sm:$0xf]
    %v1160 = vunpack.c.l.b16 %v1064
    %v1161 = vunpack.c.l.b16 %v1065
    %v1162 = vunpack.c.l.b16 %v1066
    %v1163 = vunpack.c.l.b16 %v1067
    %v1164 = vunpack.c.l.b16 %v1068
    %v1165 = vunpack.c.l.b16 %v1069
    %v1166 = vunpack.c.l.b16 %v1070
    %v1167 = vunpack.c.l.b16 %v1071
    %v1168 = vunpack.c.l.b16 %v1072
    %v1169 = vunpack.c.l.b16 %v1073
    %v1170 = vunpack.c.l.b16 %v1074
    %v1171 = vunpack.c.l.b16 %v1075
    %v1172 = vunpack.c.l.b16 %v1076
    %v1173 = vunpack.c.l.b16 %v1077
    %v1174 = vunpack.c.l.b16 %v1078
    %v1175 = vunpack.c.l.b16 %v1079
    %v1176 = vunpack.c.l.b16 %v1080
    %v1177 = vunpack.c.l.b16 %v1081
    %v1178 = vunpack.c.l.b16 %v1082
    %v1179 = vunpack.c.l.b16 %v1083
    %v1180 = vunpack.c.l.b16 %v1084
    %v1181 = vunpack.c.l.b16 %v1085
    %v1182 = vunpack.c.l.b16 %v1086
    %v1183 = vunpack.c.l.b16 %v1087
    %v1184 = vunpack.c.l.b16 %v1088
    %v1185 = vunpack.c.l.b16 %v1089
    %v1186 = vunpack.c.l.b16 %v1090
    %v1187 = vunpack.c.l.b16 %v1091
    %v1188 = vunpack.c.l.b16 %v1092
    %v1189 = vunpack.c.l.b16 %v1093
    %v1190 = vunpack.c.l.b16 %v1094
    %v1191 = vunpack.c.l.b16 %v1095
    %v1192 = vunpack.c.l.b16 %v1096
    %v1193 = vunpack.c.l.b16 %v1097
    %v1194 = vunpack.c.l.b16 %v1098
    %v1195 = vunpack.c.l.b16 %v1099
    %v1196 = vunpack.c.l.b16 %v1100
    %v1197 = vunpack.c.l.b16 %v1101
    %v1198 = vunpack.c.l.b16 %v1102
    %v1199 = vunpack.c.l.b16 %v1103
    %v1200 = vunpack.c.l.b16 %v1104
    %v1201 = vunpack.c.l.b16 %v1105
    %v1202 = vunpack.c.l.b16 %v1106
    %v1203 = vunpack.c.l.b16 %v1107
    %v1204 = vunpack.c.l.b16 %v1108
    %v1205 = vunpack.c.l.b16 %v1109
    %v1206 = vunpack.c.l.b16 %v1110
    %v1207 = vunpack.c.l.b16 %v1111
    %v1208 = vpack.c.b16 %v1161, %v1160
    %v1209 = vpack.c.b16 %v1163, %v1162
    %v1210 = vpack.c.b16 %v1165, %v1164
    %v1211 = vpack.c.b16 %v1167, %v1166
    %v1212 = vpack.c.b16 %v1169, %v1168
    %v1213 = vpack.c.b16 %v1171, %v1170
    %v1214 = vpack.c.b16 %v1173, %v1172
    %v1215 = vpack.c.b16 %v1175, %v1174
    %v1216 = vpack.c.b16 %v1177, %v1176
    %v1217 = vpack.c.b16 %v1179, %v1178
    %v1218 = vpack.c.b16 %v1181, %v1180
    %v1219 = vpack.c.b16 %v1183, %v1182
    %v1220 = vpack.c.b16 %v1185, %v1184
    %v1221 = vpack.c.b16 %v1187, %v1186
    %v1222 = vpack.c.b16 %v1189, %v1188
    %v1223 = vpack.c.b16 %v1191, %v1190
    %v1224 = vpack.c.b16 %v1193, %v1192
    %v1225 = vpack.c.b16 %v1195, %v1194
    %v1226 = vpack.c.b16 %v1197, %v1196
    %v1227 = vpack.c.b16 %v1199, %v1198
    %v1228 = vpack.c.b16 %v1201, %v1200
    %v1229 = vpack.c.b16 %v1203, %v1202
    %v1230 = vpack.c.b16 %v1205, %v1204
    %v1231 = vpack.c.b16 %v1207, %v1206
    %1256 = vmatpush.bf16.msra.mxu0 %v1215
    %1257 = vmatpush.bf16.msra.mxu0 %v1214
    %1258 = vmatpush.bf16.msra.mxu0 %v1213
    %1259 = vmatpush.bf16.msra.mxu0 %v1212
    %1260 = vmatpush.bf16.msra.mxu0 %v1211
    %1261 = vmatpush.bf16.msra.mxu0 %v1210
    %1262 = vmatpush.bf16.msra.mxu0 %v1209
    %1263 = vmatpush.bf16.msra.mxu0 %v1208
    %1264 = vmatmul.bf16.gmra.mxu0 %v1039
    %v1265 = vpop.f32.mrf.mxu0
    %v1266 = vadd.f32 0.0, %v1265
    %v1267 = vpop.f32.mrf.mxu0
    %v1268 = vadd.f32 0.0, %v1267
    %1269 = vmatmul.bf16.gmra.mxu0 %v1042
    %v1270 = vpop.f32.mrf.mxu0
    %v1271 = vadd.f32 0.0, %v1270
    %v1272 = vpop.f32.mrf.mxu0
    %v1273 = vadd.f32 0.0, %v1272
    %1274 = vmatmul.bf16.gmra.mxu0 %v1045
    %v1275 = vpop.f32.mrf.mxu0
    %v1276 = vadd.f32 0.0, %v1275
    %v1277 = vpop.f32.mrf.mxu0
    %v1278 = vadd.f32 0.0, %v1277
    %1279 = vmatmul.bf16.gmra.mxu0 %v1048
    %v1280 = vpop.f32.mrf.mxu0
    %v1281 = vadd.f32 0.0, %v1280
    %v1282 = vpop.f32.mrf.mxu0
    %v1283 = vadd.f32 0.0, %v1282
    %1284 = vmatmul.bf16.gmra.mxu0 %v1051
    %v1285 = vpop.f32.mrf.mxu0
    %v1286 = vadd.f32 0.0, %v1285
    %v1287 = vpop.f32.mrf.mxu0
    %v1288 = vadd.f32 0.0, %v1287
    %1289 = vmatmul.bf16.gmra.mxu0 %v1054
    %v1290 = vpop.f32.mrf.mxu0
    %v1291 = vadd.f32 0.0, %v1290
    %v1292 = vpop.f32.mrf.mxu0
    %v1293 = vadd.f32 0.0, %v1292
    %1294 = vmatmul.bf16.gmra.mxu0 %v1057
    %v1295 = vpop.f32.mrf.mxu0
    %v1296 = vadd.f32 0.0, %v1295
    %v1297 = vpop.f32.mrf.mxu0
    %v1298 = vadd.f32 0.0, %v1297
    %1299 = vmatmul.bf16.gmra.mxu0 %v1060
    %v1300 = vpop.f32.mrf.mxu0
    %v1301 = vadd.f32 0.0, %v1300
    %v1302 = vpop.f32.mrf.mxu0
    %v1303 = vadd.f32 0.0, %v1302
    %1304 = vdwg.mxu0
    %1305 = vmatpush.bf16.msra.mxu0 %v1223
    %1306 = vmatpush.bf16.msra.mxu0 %v1222
    %1307 = vmatpush.bf16.msra.mxu0 %v1221
    %1308 = vmatpush.bf16.msra.mxu0 %v1220
    %1309 = vmatpush.bf16.msra.mxu0 %v1219
    %1310 = vmatpush.bf16.msra.mxu0 %v1218
    %1311 = vmatpush.bf16.msra.mxu0 %v1217
    %1312 = vmatpush.bf16.msra.mxu0 %v1216
    %1313 = vmatmul.bf16.gmra.mxu0 %v1040
    %v1314 = vpop.f32.mrf.mxu0
    %v1315 = vadd.f32 %v1266, %v1314
    %v1316 = vpop.f32.mrf.mxu0
    %v1317 = vadd.f32 %v1268, %v1316
    %1318 = vmatmul.bf16.gmra.mxu0 %v1043
    %v1319 = vpop.f32.mrf.mxu0
    %v1320 = vadd.f32 %v1271, %v1319
    %v1321 = vpop.f32.mrf.mxu0
    %v1322 = vadd.f32 %v1273, %v1321
    %1323 = vmatmul.bf16.gmra.mxu0 %v1046
    %v1324 = vpop.f32.mrf.mxu0
    %v1325 = vadd.f32 %v1276, %v1324
    %v1326 = vpop.f32.mrf.mxu0
    %v1327 = vadd.f32 %v1278, %v1326
    %1328 = vmatmul.bf16.gmra.mxu0 %v1049
    %v1329 = vpop.f32.mrf.mxu0
    %v1330 = vadd.f32 %v1281, %v1329
    %v1331 = vpop.f32.mrf.mxu0
    %v1332 = vadd.f32 %v1283, %v1331
    %1333 = vmatmul.bf16.gmra.mxu0 %v1052
    %v1334 = vpop.f32.mrf.mxu0
    %v1335 = vadd.f32 %v1286, %v1334
    %v1336 = vpop.f32.mrf.mxu0
    %v1337 = vadd.f32 %v1288, %v1336
    %1338 = vmatmul.bf16.gmra.mxu0 %v1055
    %v1339 = vpop.f32.mrf.mxu0
    %v1340 = vadd.f32 %v1291, %v1339
    %v1341 = vpop.f32.mrf.mxu0
    %v1342 = vadd.f32 %v1293, %v1341
    %1343 = vmatmul.bf16.gmra.mxu0 %v1058
    %v1344 = vpop.f32.mrf.mxu0
    %v1345 = vadd.f32 %v1296, %v1344
    %v1346 = vpop.f32.mrf.mxu0
    %v1347 = vadd.f32 %v1298, %v1346
    %1348 = vmatmul.bf16.gmra.mxu0 %v1061
    %v1349 = vpop.f32.mrf.mxu0
    %v1350 = vadd.f32 %v1301, %v1349
    %v1351 = vpop.f32.mrf.mxu0
    %v1352 = vadd.f32 %v1303, %v1351
    %1353 = vdwg.mxu0
    %1354 = vmatpush.bf16.msra.mxu0 %v1231
    %1355 = vmatpush.bf16.msra.mxu0 %v1230
    %1356 = vmatpush.bf16.msra.mxu0 %v1229
    %1357 = vmatpush.bf16.msra.mxu0 %v1228
    %1358 = vmatpush.bf16.msra.mxu0 %v1227
    %1359 = vmatpush.bf16.msra.mxu0 %v1226
    %1360 = vmatpush.bf16.msra.mxu0 %v1225
    %1361 = vmatpush.bf16.msra.mxu0 %v1224
    %1362 = vmatmul.bf16.gmra.mxu0 %v1041
    %v1363 = vpop.f32.mrf.mxu0
    %v1364 = vadd.f32 %v1315, %v1363
    %v1365 = vpop.f32.mrf.mxu0
    %v1366 = vadd.f32 %v1317, %v1365
    %1367 = vmatmul.bf16.gmra.mxu0 %v1044
    %v1368 = vpop.f32.mrf.mxu0
    %v1369 = vadd.f32 %v1320, %v1368
    %v1370 = vpop.f32.mrf.mxu0
    %v1371 = vadd.f32 %v1322, %v1370
    %1372 = vmatmul.bf16.gmra.mxu0 %v1047
    %v1373 = vpop.f32.mrf.mxu0
    %v1374 = vadd.f32 %v1325, %v1373
    %v1375 = vpop.f32.mrf.mxu0
    %v1376 = vadd.f32 %v1327, %v1375
    %1377 = vmatmul.bf16.gmra.mxu0 %v1050
    %v1378 = vpop.f32.mrf.mxu0
    %v1379 = vadd.f32 %v1330, %v1378
    %v1380 = vpop.f32.mrf.mxu0
    %v1381 = vadd.f32 %v1332, %v1380
    %1382 = vmatmul.bf16.gmra.mxu0 %v1053
    %v1383 = vpop.f32.mrf.mxu0
    %v1384 = vadd.f32 %v1335, %v1383
    %v1385 = vpop.f32.mrf.mxu0
    %v1386 = vadd.f32 %v1337, %v1385
    %1387 = vmatmul.bf16.gmra.mxu0 %v1056
    %v1388 = vpop.f32.mrf.mxu0
    %v1389 = vadd.f32 %v1340, %v1388
    %v1390 = vpop.f32.mrf.mxu0
    %v1391 = vadd.f32 %v1342, %v1390
    %1392 = vmatmul.bf16.gmra.mxu0 %v1059
    %v1393 = vpop.f32.mrf.mxu0
    %v1394 = vadd.f32 %v1345, %v1393
    %v1395 = vpop.f32.mrf.mxu0
    %v1396 = vadd.f32 %v1347, %v1395
    %1397 = vmatmul.bf16.gmra.mxu0 %v1062
    %v1398 = vpop.f32.mrf.mxu0
    %v1399 = vadd.f32 %v1350, %v1398
    %v1400 = vpop.f32.mrf.mxu0
    %v1401 = vadd.f32 %v1352, %v1400
    %1402 = vdwg.mxu0
    %v1403 = vadd.f32 %v951, %v1364
    %v1404 = vadd.f32 %v953, %v1366
    %v1405 = vadd.f32 %v956, %v1369
    %v1406 = vadd.f32 %v958, %v1371
    %v1407 = vadd.f32 %v961, %v1374
    %v1408 = vadd.f32 %v963, %v1376
    %v1409 = vadd.f32 %v966, %v1379
    %v1410 = vadd.f32 %v968, %v1381
    %v1411 = vadd.f32 %v971, %v1384
    %v1412 = vadd.f32 %v973, %v1386
    %v1413 = vadd.f32 %v976, %v1389
    %v1414 = vadd.f32 %v978, %v1391
    %v1415 = vadd.f32 %v981, %v1394
    %v1416 = vadd.f32 %v983, %v1396
    %v1417 = vadd.f32 %v986, %v1399
    %v1418 = vadd.f32 %v988, %v1401
    %v1419 = vld [vmem:[%s3] sm:$0x1]
    %v1421 = vperm.slane %v1419, 0
    %v1423 = vmul.f32 %v1403, %v1421
    %v1424 = vmul.f32 %v1404, %v1421
    %v1425 = vmul.f32 %v1405, %v1421
    %v1426 = vmul.f32 %v1406, %v1421
    %v1427 = vmul.f32 %v1407, %v1421
    %v1428 = vmul.f32 %v1408, %v1421
    %v1429 = vmul.f32 %v1409, %v1421
    %v1430 = vmul.f32 %v1410, %v1421
    %v1431 = vmul.f32 %v1411, %v1421
    %v1432 = vmul.f32 %v1412, %v1421
    %v1433 = vmul.f32 %v1413, %v1421
    %v1434 = vmul.f32 %v1414, %v1421
    %v1435 = vmul.f32 %v1415, %v1421
    %v1436 = vmul.f32 %v1416, %v1421
    %v1437 = vmul.f32 %v1417, %v1421
    %v1438 = vmul.f32 %v1418, %v1421
    %v1439 = vld [vmem:[%s4] sm:$0x1]
    %v1441 = vperm.slane %v1439, 0
    %v1443 = vadd.f32 %v1423, %v1441
    %v1444 = vadd.f32 %v1424, %v1441
    %v1445 = vadd.f32 %v1425, %v1441
    %v1446 = vadd.f32 %v1426, %v1441
    %v1447 = vadd.f32 %v1427, %v1441
    %v1448 = vadd.f32 %v1428, %v1441
    %v1449 = vadd.f32 %v1429, %v1441
    %v1450 = vadd.f32 %v1430, %v1441
    %v1451 = vadd.f32 %v1431, %v1441
    %v1452 = vadd.f32 %v1432, %v1441
    %v1453 = vadd.f32 %v1433, %v1441
    %v1454 = vadd.f32 %v1434, %v1441
    %v1455 = vadd.f32 %v1435, %v1441
    %v1456 = vadd.f32 %v1436, %v1441
    %v1457 = vadd.f32 %v1437, %v1441
    %v1458 = vadd.f32 %v1438, %v1441
    %v1459 = vmax.f32 %v1443, 0.0
    %v1460 = vmax.f32 %v1444, 0.0
    %v1461 = vmax.f32 %v1445, 0.0
    %v1462 = vmax.f32 %v1446, 0.0
    %v1463 = vmax.f32 %v1447, 0.0
    %v1464 = vmax.f32 %v1448, 0.0
    %v1465 = vmax.f32 %v1449, 0.0
    %v1466 = vmax.f32 %v1450, 0.0
    %v1467 = vmax.f32 %v1451, 0.0
    %v1468 = vmax.f32 %v1452, 0.0
    %v1469 = vmax.f32 %v1453, 0.0
    %v1470 = vmax.f32 %v1454, 0.0
    %v1471 = vmax.f32 %v1455, 0.0
    %v1472 = vmax.f32 %v1456, 0.0
    %v1473 = vmax.f32 %v1457, 0.0
    %v1474 = vmax.f32 %v1458, 0.0
    %1475 = vst [vmem:[%s150 + $0x8] sm:$0xff] %v1459
    %1476 = vst [vmem:[%s150 + $0x20] sm:$0xff] %v1460
    %1477 = vst [vmem:[%s150 + $0x38] sm:$0xff] %v1461
    %1478 = vst [vmem:[%s150 + $0x50] sm:$0xff] %v1462
    %1479 = vst [vmem:[%s150 + $0x68] sm:$0xff] %v1463
    %1480 = vst [vmem:[%s150 + $0x80] sm:$0xff] %v1464
    %1481 = vst [vmem:[%s150 + $0x98] sm:$0xff] %v1465
    %1482 = vst [vmem:[%s150 + $0xb0] sm:$0xff] %v1466
    %1483 = vst [vmem:[%s150 + $0xf8] sm:$0xff] %v1467
    %1484 = vst [vmem:[%s150 + $0x110] sm:$0xff] %v1468
    %1485 = vst [vmem:[%s150 + $0x128] sm:$0xff] %v1469
    %1486 = vst [vmem:[%s150 + $0x140] sm:$0xff] %v1470
    %1487 = vst [vmem:[%s150 + $0x158] sm:$0xff] %v1471
    %1488 = vst [vmem:[%s150 + $0x170] sm:$0xff] %v1472
    %1489 = vst [vmem:[%s150 + $0x188] sm:$0xff] %v1473
    %1490 = vst [vmem:[%s150 + $0x1a0] sm:$0xff] %v1474
    %v1491 = vld [vmem:[#allocation2 + $0x7] sm:$0xff]
    %v1492 = vld [vmem:[#allocation2 + $0x1f] sm:$0xff]
    %v1493 = vld [vmem:[#allocation2 + $0x37] sm:$0xff]
    %v1494 = vld [vmem:[#allocation2 + $0x4f] sm:$0xff]
    %v1495 = vld [vmem:[#allocation2 + $0x67] sm:$0xff]
    %v1496 = vld [vmem:[#allocation2 + $0x7f] sm:$0xff]
    %v1497 = vld [vmem:[#allocation2 + $0x97] sm:$0xff]
    %v1498 = vld [vmem:[#allocation2 + $0xaf] sm:$0xff]
    %v1499 = vld [vmem:[#allocation2 + $0xf7] sm:$0xff]
    %v1500 = vld [vmem:[#allocation2 + $0x10f] sm:$0xff]
    %v1501 = vld [vmem:[#allocation2 + $0x127] sm:$0xff]
    %v1502 = vld [vmem:[#allocation2 + $0x13f] sm:$0xff]
    %v1503 = vld [vmem:[#allocation2 + $0x157] sm:$0xff]
    %v1504 = vld [vmem:[#allocation2 + $0x16f] sm:$0xff]
    %v1505 = vld [vmem:[#allocation2 + $0x187] sm:$0xff]
    %v1506 = vld [vmem:[#allocation2 + $0x19f] sm:$0xff]
    %v1507 = vld [vmem:[#allocation2 + $0x8] sm:$0xff]
    %v1508 = vld [vmem:[#allocation2 + $0x20] sm:$0xff]
    %v1509 = vld [vmem:[#allocation2 + $0x38] sm:$0xff]
    %v1510 = vld [vmem:[#allocation2 + $0x50] sm:$0xff]
    %v1511 = vld [vmem:[#allocation2 + $0x68] sm:$0xff]
    %v1512 = vld [vmem:[#allocation2 + $0x80] sm:$0xff]
    %v1513 = vld [vmem:[#allocation2 + $0x98] sm:$0xff]
    %v1514 = vld [vmem:[#allocation2 + $0xb0] sm:$0xff]
    %v1515 = vld [vmem:[#allocation2 + $0xf8] sm:$0xff]
    %v1516 = vld [vmem:[#allocation2 + $0x110] sm:$0xff]
    %v1517 = vld [vmem:[#allocation2 + $0x128] sm:$0xff]
    %v1518 = vld [vmem:[#allocation2 + $0x140] sm:$0xff]
    %v1519 = vld [vmem:[#allocation2 + $0x158] sm:$0xff]
    %v1520 = vld [vmem:[#allocation2 + $0x170] sm:$0xff]
    %v1521 = vld [vmem:[#allocation2 + $0x188] sm:$0xff]
    %v1522 = vld [vmem:[#allocation2 + $0x1a0] sm:$0xff]
    %v1523 = vld [vmem:[#allocation2 + $0x9] sm:$0xff]
    %v1524 = vld [vmem:[#allocation2 + $0x21] sm:$0xff]
    %v1525 = vld [vmem:[#allocation2 + $0x39] sm:$0xff]
    %v1526 = vld [vmem:[#allocation2 + $0x51] sm:$0xff]
    %v1527 = vld [vmem:[#allocation2 + $0x69] sm:$0xff]
    %v1528 = vld [vmem:[#allocation2 + $0x81] sm:$0xff]
    %v1529 = vld [vmem:[#allocation2 + $0x99] sm:$0xff]
    %v1530 = vld [vmem:[#allocation2 + $0xb1] sm:$0xff]
    %v1531 = vld [vmem:[#allocation2 + $0xf9] sm:$0xff]
    %v1532 = vld [vmem:[#allocation2 + $0x111] sm:$0xff]
    %v1533 = vld [vmem:[#allocation2 + $0x129] sm:$0xff]
    %v1534 = vld [vmem:[#allocation2 + $0x141] sm:$0xff]
    %v1535 = vld [vmem:[#allocation2 + $0x159] sm:$0xff]
    %v1536 = vld [vmem:[#allocation2 + $0x171] sm:$0xff]
    %v1537 = vld [vmem:[#allocation2 + $0x189] sm:$0xff]
    %v1538 = vld [vmem:[#allocation2 + $0x1a1] sm:$0xff]
    %v1539 = vpack.c.bf16 %v1492, %v1491
    %v1540 = vpack.c.bf16 %v1508, %v1507
    %v1541 = vpack.c.bf16 %v1524, %v1523
    %v1542 = vpack.c.bf16 %v1494, %v1493
    %v1543 = vpack.c.bf16 %v1510, %v1509
    %v1544 = vpack.c.bf16 %v1526, %v1525
    %v1545 = vpack.c.bf16 %v1496, %v1495
    %v1546 = vpack.c.bf16 %v1512, %v1511
    %v1547 = vpack.c.bf16 %v1528, %v1527
    %v1548 = vpack.c.bf16 %v1498, %v1497
    %v1549 = vpack.c.bf16 %v1514, %v1513
    %v1550 = vpack.c.bf16 %v1530, %v1529
    %v1551 = vpack.c.bf16 %v1500, %v1499
    %v1552 = vpack.c.bf16 %v1516, %v1515
    %v1553 = vpack.c.bf16 %v1532, %v1531
    %v1554 = vpack.c.bf16 %v1502, %v1501
    %v1555 = vpack.c.bf16 %v1518, %v1517
    %v1556 = vpack.c.bf16 %v1534, %v1533
    %v1557 = vpack.c.bf16 %v1504, %v1503
    %v1558 = vpack.c.bf16 %v1520, %v1519
    %v1559 = vpack.c.bf16 %v1536, %v1535
    %v1560 = vpack.c.bf16 %v1506, %v1505
    %v1561 = vpack.c.bf16 %v1522, %v1521
    %v1562 = vpack.c.bf16 %v1538, %v1537
    %v1563 = vld [vmem:[#allocation8] sm:$0xf]
    %v1564 = vld [vmem:[#allocation8 + $0x4] sm:$0xf]
    %v1565 = vld [vmem:[#allocation8 + $0x8] sm:$0xf]
    %v1566 = vld [vmem:[#allocation8 + $0xc] sm:$0xf]
    %v1567 = vld [vmem:[#allocation8 + $0x10] sm:$0xf]
    %v1568 = vld [vmem:[#allocation8 + $0x14] sm:$0xf]
    %v1569 = vld [vmem:[#allocation8 + $0x18] sm:$0xf]
    %v1570 = vld [vmem:[#allocation8 + $0x1c] sm:$0xf]
    %v1571 = vld [vmem:[#allocation8 + $0x20] sm:$0xf]
    %v1572 = vld [vmem:[#allocation8 + $0x24] sm:$0xf]
    %v1573 = vld [vmem:[#allocation8 + $0x28] sm:$0xf]
    %v1574 = vld [vmem:[#allocation8 + $0x2c] sm:$0xf]
    %v1575 = vld [vmem:[#allocation8 + $0x30] sm:$0xf]
    %v1576 = vld [vmem:[#allocation8 + $0x34] sm:$0xf]
    %v1577 = vld [vmem:[#allocation8 + $0x38] sm:$0xf]
    %v1578 = vld [vmem:[#allocation8 + $0x3c] sm:$0xf]
    %v1579 = vld [vmem:[#allocation8 + $0x40] sm:$0xf]
    %v1580 = vld [vmem:[#allocation8 + $0x44] sm:$0xf]
    %v1581 = vld [vmem:[#allocation8 + $0x48] sm:$0xf]
    %v1582 = vld [vmem:[#allocation8 + $0x4c] sm:$0xf]
    %v1583 = vld [vmem:[#allocation8 + $0x50] sm:$0xf]
    %v1584 = vld [vmem:[#allocation8 + $0x54] sm:$0xf]
    %v1585 = vld [vmem:[#allocation8 + $0x58] sm:$0xf]
    %v1586 = vld [vmem:[#allocation8 + $0x5c] sm:$0xf]
    %v1587 = vld [vmem:[#allocation8 + $0x60] sm:$0xf]
    %v1588 = vld [vmem:[#allocation8 + $0x64] sm:$0xf]
    %v1589 = vld [vmem:[#allocation8 + $0x68] sm:$0xf]
    %v1590 = vld [vmem:[#allocation8 + $0x6c] sm:$0xf]
    %v1591 = vld [vmem:[#allocation8 + $0x70] sm:$0xf]
    %v1592 = vld [vmem:[#allocation8 + $0x74] sm:$0xf]
    %v1593 = vld [vmem:[#allocation8 + $0x78] sm:$0xf]
    %v1594 = vld [vmem:[#allocation8 + $0x7c] sm:$0xf]
    %v1595 = vld [vmem:[#allocation8 + $0x80] sm:$0xf]
    %v1596 = vld [vmem:[#allocation8 + $0x84] sm:$0xf]
    %v1597 = vld [vmem:[#allocation8 + $0x88] sm:$0xf]
    %v1598 = vld [vmem:[#allocation8 + $0x8c] sm:$0xf]
    %v1599 = vld [vmem:[#allocation8 + $0x90] sm:$0xf]
    %v1600 = vld [vmem:[#allocation8 + $0x94] sm:$0xf]
    %v1601 = vld [vmem:[#allocation8 + $0x98] sm:$0xf]
    %v1602 = vld [vmem:[#allocation8 + $0x9c] sm:$0xf]
    %v1603 = vld [vmem:[#allocation8 + $0xa0] sm:$0xf]
    %v1604 = vld [vmem:[#allocation8 + $0xa4] sm:$0xf]
    %v1605 = vld [vmem:[#allocation8 + $0xa8] sm:$0xf]
    %v1606 = vld [vmem:[#allocation8 + $0xac] sm:$0xf]
    %v1607 = vld [vmem:[#allocation8 + $0xb0] sm:$0xf]
    %v1608 = vld [vmem:[#allocation8 + $0xb4] sm:$0xf]
    %v1609 = vld [vmem:[#allocation8 + $0xb8] sm:$0xf]
    %v1610 = vld [vmem:[#allocation8 + $0xbc] sm:$0xf]
    %v1611 = vld [vmem:[%s150 + $0x7] sm:$0xff]
    %v1612 = vld [vmem:[%s150 + $0x1f] sm:$0xff]
    %v1613 = vld [vmem:[%s150 + $0x37] sm:$0xff]
    %v1614 = vld [vmem:[%s150 + $0x4f] sm:$0xff]
    %v1615 = vld [vmem:[%s150 + $0x67] sm:$0xff]
    %v1616 = vld [vmem:[%s150 + $0x7f] sm:$0xff]
    %v1617 = vld [vmem:[%s150 + $0x97] sm:$0xff]
    %v1618 = vld [vmem:[%s150 + $0xaf] sm:$0xff]
    %v1619 = vld [vmem:[%s150 + $0xf7] sm:$0xff]
    %v1620 = vld [vmem:[%s150 + $0x10f] sm:$0xff]
    %v1621 = vld [vmem:[%s150 + $0x127] sm:$0xff]
    %v1622 = vld [vmem:[%s150 + $0x13f] sm:$0xff]
    %v1623 = vld [vmem:[%s150 + $0x157] sm:$0xff]
    %v1624 = vld [vmem:[%s150 + $0x16f] sm:$0xff]
    %v1625 = vld [vmem:[%s150 + $0x187] sm:$0xff]
    %v1626 = vld [vmem:[%s150 + $0x19f] sm:$0xff]
    %v1627 = vld [vmem:[%s150 + $0x8] sm:$0xff]
    %v1628 = vld [vmem:[%s150 + $0x20] sm:$0xff]
    %v1629 = vld [vmem:[%s150 + $0x38] sm:$0xff]
    %v1630 = vld [vmem:[%s150 + $0x50] sm:$0xff]
    %v1631 = vld [vmem:[%s150 + $0x68] sm:$0xff]
    %v1632 = vld [vmem:[%s150 + $0x80] sm:$0xff]
    %v1633 = vld [vmem:[%s150 + $0x98] sm:$0xff]
    %v1634 = vld [vmem:[%s150 + $0xb0] sm:$0xff]
    %v1635 = vld [vmem:[%s150 + $0xf8] sm:$0xff]
    %v1636 = vld [vmem:[%s150 + $0x110] sm:$0xff]
    %v1637 = vld [vmem:[%s150 + $0x128] sm:$0xff]
    %v1638 = vld [vmem:[%s150 + $0x140] sm:$0xff]
    %v1639 = vld [vmem:[%s150 + $0x158] sm:$0xff]
    %v1640 = vld [vmem:[%s150 + $0x170] sm:$0xff]
    %v1641 = vld [vmem:[%s150 + $0x188] sm:$0xff]
    %v1642 = vld [vmem:[%s150 + $0x1a0] sm:$0xff]
    %v1643 = vld [vmem:[%s150 + $0x9] sm:$0xff]
    %v1644 = vld [vmem:[%s150 + $0x21] sm:$0xff]
    %v1645 = vld [vmem:[%s150 + $0x39] sm:$0xff]
    %v1646 = vld [vmem:[%s150 + $0x51] sm:$0xff]
    %v1647 = vld [vmem:[%s150 + $0x69] sm:$0xff]
    %v1648 = vld [vmem:[%s150 + $0x81] sm:$0xff]
    %v1649 = vld [vmem:[%s150 + $0x99] sm:$0xff]
    %v1650 = vld [vmem:[%s150 + $0xb1] sm:$0xff]
    %v1651 = vld [vmem:[%s150 + $0xf9] sm:$0xff]
    %v1652 = vld [vmem:[%s150 + $0x111] sm:$0xff]
    %v1653 = vld [vmem:[%s150 + $0x129] sm:$0xff]
    %v1654 = vld [vmem:[%s150 + $0x141] sm:$0xff]
    %v1655 = vld [vmem:[%s150 + $0x159] sm:$0xff]
    %v1656 = vld [vmem:[%s150 + $0x171] sm:$0xff]
    %v1657 = vld [vmem:[%s150 + $0x189] sm:$0xff]
    %v1658 = vld [vmem:[%s150 + $0x1a1] sm:$0xff]
    %v1659 = vpack.c.bf16 %v1612, %v1611
    %v1660 = vpack.c.bf16 %v1628, %v1627
    %v1661 = vpack.c.bf16 %v1644, %v1643
    %v1662 = vpack.c.bf16 %v1614, %v1613
    %v1663 = vpack.c.bf16 %v1630, %v1629
    %v1664 = vpack.c.bf16 %v1646, %v1645
    %v1665 = vpack.c.bf16 %v1616, %v1615
    %v1666 = vpack.c.bf16 %v1632, %v1631
    %v1667 = vpack.c.bf16 %v1648, %v1647
    %v1668 = vpack.c.bf16 %v1618, %v1617
    %v1669 = vpack.c.bf16 %v1634, %v1633
    %v1670 = vpack.c.bf16 %v1650, %v1649
    %v1671 = vpack.c.bf16 %v1620, %v1619
    %v1672 = vpack.c.bf16 %v1636, %v1635
    %v1673 = vpack.c.bf16 %v1652, %v1651
    %v1674 = vpack.c.bf16 %v1622, %v1621
    %v1675 = vpack.c.bf16 %v1638, %v1637
    %v1676 = vpack.c.bf16 %v1654, %v1653
    %v1677 = vpack.c.bf16 %v1624, %v1623
    %v1678 = vpack.c.bf16 %v1640, %v1639
    %v1679 = vpack.c.bf16 %v1656, %v1655
    %v1680 = vpack.c.bf16 %v1626, %v1625
    %v1681 = vpack.c.bf16 %v1642, %v1641
    %v1682 = vpack.c.bf16 %v1658, %v1657
    %s1683 = scalar_lea.vmem [#allocation8], 192
    %v1684 = vld [vmem:[%s1683] sm:$0xf]
    %v1685 = vld [vmem:[%s1683 + $0x4] sm:$0xf]
    %v1686 = vld [vmem:[%s1683 + $0x8] sm:$0xf]
    %v1687 = vld [vmem:[%s1683 + $0xc] sm:$0xf]
    %v1688 = vld [vmem:[%s1683 + $0x10] sm:$0xf]
    %v1689 = vld [vmem:[%s1683 + $0x14] sm:$0xf]
    %v1690 = vld [vmem:[%s1683 + $0x18] sm:$0xf]
    %v1691 = vld [vmem:[%s1683 + $0x1c] sm:$0xf]
    %v1692 = vld [vmem:[%s1683 + $0x20] sm:$0xf]
    %v1693 = vld [vmem:[%s1683 + $0x24] sm:$0xf]
    %v1694 = vld [vmem:[%s1683 + $0x28] sm:$0xf]
    %v1695 = vld [vmem:[%s1683 + $0x2c] sm:$0xf]
    %v1696 = vld [vmem:[%s1683 + $0x30] sm:$0xf]
    %v1697 = vld [vmem:[%s1683 + $0x34] sm:$0xf]
    %v1698 = vld [vmem:[%s1683 + $0x38] sm:$0xf]
    %v1699 = vld [vmem:[%s1683 + $0x3c] sm:$0xf]
    %v1700 = vld [vmem:[%s1683 + $0x40] sm:$0xf]
    %v1701 = vld [vmem:[%s1683 + $0x44] sm:$0xf]
    %v1702 = vld [vmem:[%s1683 + $0x48] sm:$0xf]
    %v1703 = vld [vmem:[%s1683 + $0x4c] sm:$0xf]
    %v1704 = vld [vmem:[%s1683 + $0x50] sm:$0xf]
    %v1705 = vld [vmem:[%s1683 + $0x54] sm:$0xf]
    %v1706 = vld [vmem:[%s1683 + $0x58] sm:$0xf]
    %v1707 = vld [vmem:[%s1683 + $0x5c] sm:$0xf]
    %v1708 = vld [vmem:[%s1683 + $0x60] sm:$0xf]
    %v1709 = vld [vmem:[%s1683 + $0x64] sm:$0xf]
    %v1710 = vld [vmem:[%s1683 + $0x68] sm:$0xf]
    %v1711 = vld [vmem:[%s1683 + $0x6c] sm:$0xf]
    %v1712 = vld [vmem:[%s1683 + $0x70] sm:$0xf]
    %v1713 = vld [vmem:[%s1683 + $0x74] sm:$0xf]
    %v1714 = vld [vmem:[%s1683 + $0x78] sm:$0xf]
    %v1715 = vld [vmem:[%s1683 + $0x7c] sm:$0xf]
    %v1716 = vld [vmem:[%s1683 + $0x80] sm:$0xf]
    %v1717 = vld [vmem:[%s1683 + $0x84] sm:$0xf]
    %v1718 = vld [vmem:[%s1683 + $0x88] sm:$0xf]
    %v1719 = vld [vmem:[%s1683 + $0x8c] sm:$0xf]
    %v1720 = vld [vmem:[%s1683 + $0x90] sm:$0xf]
    %v1721 = vld [vmem:[%s1683 + $0x94] sm:$0xf]
    %v1722 = vld [vmem:[%s1683 + $0x98] sm:$0xf]
    %v1723 = vld [vmem:[%s1683 + $0x9c] sm:$0xf]
    %v1724 = vld [vmem:[%s1683 + $0xa0] sm:$0xf]
    %v1725 = vld [vmem:[%s1683 + $0xa4] sm:$0xf]
    %v1726 = vld [vmem:[%s1683 + $0xa8] sm:$0xf]
    %v1727 = vld [vmem:[%s1683 + $0xac] sm:$0xf]
    %v1728 = vld [vmem:[%s1683 + $0xb0] sm:$0xf]
    %v1729 = vld [vmem:[%s1683 + $0xb4] sm:$0xf]
    %v1730 = vld [vmem:[%s1683 + $0xb8] sm:$0xf]
    %v1731 = vld [vmem:[%s1683 + $0xbc] sm:$0xf]
    %v1780 = vunpack.c.l.b16 %v1684
    %v1781 = vunpack.c.l.b16 %v1685
    %v1782 = vunpack.c.l.b16 %v1686
    %v1783 = vunpack.c.l.b16 %v1687
    %v1784 = vunpack.c.l.b16 %v1688
    %v1785 = vunpack.c.l.b16 %v1689
    %v1786 = vunpack.c.l.b16 %v1690
    %v1787 = vunpack.c.l.b16 %v1691
    %v1788 = vunpack.c.l.b16 %v1692
    %v1789 = vunpack.c.l.b16 %v1693
    %v1790 = vunpack.c.l.b16 %v1694
    %v1791 = vunpack.c.l.b16 %v1695
    %v1792 = vunpack.c.l.b16 %v1696
    %v1793 = vunpack.c.l.b16 %v1697
    %v1794 = vunpack.c.l.b16 %v1698
    %v1795 = vunpack.c.l.b16 %v1699
    %v1796 = vunpack.c.l.b16 %v1700
    %v1797 = vunpack.c.l.b16 %v1701
    %v1798 = vunpack.c.l.b16 %v1702
    %v1799 = vunpack.c.l.b16 %v1703
    %v1800 = vunpack.c.l.b16 %v1704
    %v1801 = vunpack.c.l.b16 %v1705
    %v1802 = vunpack.c.l.b16 %v1706
    %v1803 = vunpack.c.l.b16 %v1707
    %v1804 = vunpack.c.l.b16 %v1708
    %v1805 = vunpack.c.l.b16 %v1709
    %v1806 = vunpack.c.l.b16 %v1710
    %v1807 = vunpack.c.l.b16 %v1711
    %v1808 = vunpack.c.l.b16 %v1712
    %v1809 = vunpack.c.l.b16 %v1713
    %v1810 = vunpack.c.l.b16 %v1714
    %v1811 = vunpack.c.l.b16 %v1715
    %v1812 = vunpack.c.l.b16 %v1716
    %v1813 = vunpack.c.l.b16 %v1717
    %v1814 = vunpack.c.l.b16 %v1718
    %v1815 = vunpack.c.l.b16 %v1719
    %v1816 = vunpack.c.l.b16 %v1720
    %v1817 = vunpack.c.l.b16 %v1721
    %v1818 = vunpack.c.l.b16 %v1722
    %v1819 = vunpack.c.l.b16 %v1723
    %v1820 = vunpack.c.l.b16 %v1724
    %v1821 = vunpack.c.l.b16 %v1725
    %v1822 = vunpack.c.l.b16 %v1726
    %v1823 = vunpack.c.l.b16 %v1727
    %v1824 = vunpack.c.l.b16 %v1728
    %v1825 = vunpack.c.l.b16 %v1729
    %v1826 = vunpack.c.l.b16 %v1730
    %v1827 = vunpack.c.l.b16 %v1731
    %v1828 = vpack.c.b16 %v1781, %v1780
    %v1829 = vpack.c.b16 %v1783, %v1782
    %v1830 = vpack.c.b16 %v1785, %v1784
    %v1831 = vpack.c.b16 %v1787, %v1786
    %v1832 = vpack.c.b16 %v1789, %v1788
    %v1833 = vpack.c.b16 %v1791, %v1790
    %v1834 = vpack.c.b16 %v1793, %v1792
    %v1835 = vpack.c.b16 %v1795, %v1794
    %v1836 = vpack.c.b16 %v1797, %v1796
    %v1837 = vpack.c.b16 %v1799, %v1798
    %v1838 = vpack.c.b16 %v1801, %v1800
    %v1839 = vpack.c.b16 %v1803, %v1802
    %v1840 = vpack.c.b16 %v1805, %v1804
    %v1841 = vpack.c.b16 %v1807, %v1806
    %v1842 = vpack.c.b16 %v1809, %v1808
    %v1843 = vpack.c.b16 %v1811, %v1810
    %v1844 = vpack.c.b16 %v1813, %v1812
    %v1845 = vpack.c.b16 %v1815, %v1814
    %v1846 = vpack.c.b16 %v1817, %v1816
    %v1847 = vpack.c.b16 %v1819, %v1818
    %v1848 = vpack.c.b16 %v1821, %v1820
    %v1849 = vpack.c.b16 %v1823, %v1822
    %v1850 = vpack.c.b16 %v1825, %v1824
    %v1851 = vpack.c.b16 %v1827, %v1826
    %1876 = vmatpush.bf16.msra.mxu0 %v1835
    %1877 = vmatpush.bf16.msra.mxu0 %v1834
    %1878 = vmatpush.bf16.msra.mxu0 %v1833
    %1879 = vmatpush.bf16.msra.mxu0 %v1832
    %1880 = vmatpush.bf16.msra.mxu0 %v1831
    %1881 = vmatpush.bf16.msra.mxu0 %v1830
    %1882 = vmatpush.bf16.msra.mxu0 %v1829
    %1883 = vmatpush.bf16.msra.mxu0 %v1828
    %1884 = vmatmul.bf16.gmra.mxu0 %v1659
    %v1885 = vpop.f32.mrf.mxu0
    %v1886 = vadd.f32 0.0, %v1885
    %v1887 = vpop.f32.mrf.mxu0
    %v1888 = vadd.f32 0.0, %v1887
    %1889 = vmatmul.bf16.gmra.mxu0 %v1662
    %v1890 = vpop.f32.mrf.mxu0
    %v1891 = vadd.f32 0.0, %v1890
    %v1892 = vpop.f32.mrf.mxu0
    %v1893 = vadd.f32 0.0, %v1892
    %1894 = vmatmul.bf16.gmra.mxu0 %v1665
    %v1895 = vpop.f32.mrf.mxu0
    %v1896 = vadd.f32 0.0, %v1895
    %v1897 = vpop.f32.mrf.mxu0
    %v1898 = vadd.f32 0.0, %v1897
    %1899 = vmatmul.bf16.gmra.mxu0 %v1668
    %v1900 = vpop.f32.mrf.mxu0
    %v1901 = vadd.f32 0.0, %v1900
    %v1902 = vpop.f32.mrf.mxu0
    %v1903 = vadd.f32 0.0, %v1902
    %1904 = vmatmul.bf16.gmra.mxu0 %v1671
    %v1905 = vpop.f32.mrf.mxu0
    %v1906 = vadd.f32 0.0, %v1905
    %v1907 = vpop.f32.mrf.mxu0
    %v1908 = vadd.f32 0.0, %v1907
    %1909 = vmatmul.bf16.gmra.mxu0 %v1674
    %v1910 = vpop.f32.mrf.mxu0
    %v1911 = vadd.f32 0.0, %v1910
    %v1912 = vpop.f32.mrf.mxu0
    %v1913 = vadd.f32 0.0, %v1912
    %1914 = vmatmul.bf16.gmra.mxu0 %v1677
    %v1915 = vpop.f32.mrf.mxu0
    %v1916 = vadd.f32 0.0, %v1915
    %v1917 = vpop.f32.mrf.mxu0
    %v1918 = vadd.f32 0.0, %v1917
    %1919 = vmatmul.bf16.gmra.mxu0 %v1680
    %v1920 = vpop.f32.mrf.mxu0
    %v1921 = vadd.f32 0.0, %v1920
    %v1922 = vpop.f32.mrf.mxu0
    %v1923 = vadd.f32 0.0, %v1922
    %1924 = vdwg.mxu0
    %1925 = vmatpush.bf16.msra.mxu0 %v1843
    %1926 = vmatpush.bf16.msra.mxu0 %v1842
    %1927 = vmatpush.bf16.msra.mxu0 %v1841
    %1928 = vmatpush.bf16.msra.mxu0 %v1840
    %1929 = vmatpush.bf16.msra.mxu0 %v1839
    %1930 = vmatpush.bf16.msra.mxu0 %v1838
    %1931 = vmatpush.bf16.msra.mxu0 %v1837
    %1932 = vmatpush.bf16.msra.mxu0 %v1836
    %1933 = vmatmul.bf16.gmra.mxu0 %v1660
    %v1934 = vpop.f32.mrf.mxu0
    %v1935 = vadd.f32 %v1886, %v1934
    %v1936 = vpop.f32.mrf.mxu0
    %v1937 = vadd.f32 %v1888, %v1936
    %1938 = vmatmul.bf16.gmra.mxu0 %v1663
    %v1939 = vpop.f32.mrf.mxu0
    %v1940 = vadd.f32 %v1891, %v1939
    %v1941 = vpop.f32.mrf.mxu0
    %v1942 = vadd.f32 %v1893, %v1941
    %1943 = vmatmul.bf16.gmra.mxu0 %v1666
    %v1944 = vpop.f32.mrf.mxu0
    %v1945 = vadd.f32 %v1896, %v1944
    %v1946 = vpop.f32.mrf.mxu0
    %v1947 = vadd.f32 %v1898, %v1946
    %1948 = vmatmul.bf16.gmra.mxu0 %v1669
    %v1949 = vpop.f32.mrf.mxu0
    %v1950 = vadd.f32 %v1901, %v1949
    %v1951 = vpop.f32.mrf.mxu0
    %v1952 = vadd.f32 %v1903, %v1951
    %1953 = vmatmul.bf16.gmra.mxu0 %v1672
    %v1954 = vpop.f32.mrf.mxu0
    %v1955 = vadd.f32 %v1906, %v1954
    %v1956 = vpop.f32.mrf.mxu0
    %v1957 = vadd.f32 %v1908, %v1956
    %1958 = vmatmul.bf16.gmra.mxu0 %v1675
    %v1959 = vpop.f32.mrf.mxu0
    %v1960 = vadd.f32 %v1911, %v1959
    %v1961 = vpop.f32.mrf.mxu0
    %v1962 = vadd.f32 %v1913, %v1961
    %1963 = vmatmul.bf16.gmra.mxu0 %v1678
    %v1964 = vpop.f32.mrf.mxu0
    %v1965 = vadd.f32 %v1916, %v1964
    %v1966 = vpop.f32.mrf.mxu0
    %v1967 = vadd.f32 %v1918, %v1966
    %1968 = vmatmul.bf16.gmra.mxu0 %v1681
    %v1969 = vpop.f32.mrf.mxu0
    %v1970 = vadd.f32 %v1921, %v1969
    %v1971 = vpop.f32.mrf.mxu0
    %v1972 = vadd.f32 %v1923, %v1971
    %1973 = vdwg.mxu0
    %1974 = vmatpush.bf16.msra.mxu0 %v1851
    %1975 = vmatpush.bf16.msra.mxu0 %v1850
    %1976 = vmatpush.bf16.msra.mxu0 %v1849
    %1977 = vmatpush.bf16.msra.mxu0 %v1848
    %1978 = vmatpush.bf16.msra.mxu0 %v1847
    %1979 = vmatpush.bf16.msra.mxu0 %v1846
    %1980 = vmatpush.bf16.msra.mxu0 %v1845
    %1981 = vmatpush.bf16.msra.mxu0 %v1844
    %1982 = vmatmul.bf16.gmra.mxu0 %v1661
    %v1983 = vpop.f32.mrf.mxu0
    %v1984 = vadd.f32 %v1935, %v1983
    %v1985 = vpop.f32.mrf.mxu0
    %v1986 = vadd.f32 %v1937, %v1985
    %1987 = vmatmul.bf16.gmra.mxu0 %v1664
    %v1988 = vpop.f32.mrf.mxu0
    %v1989 = vadd.f32 %v1940, %v1988
    %v1990 = vpop.f32.mrf.mxu0
    %v1991 = vadd.f32 %v1942, %v1990
    %1992 = vmatmul.bf16.gmra.mxu0 %v1667
    %v1993 = vpop.f32.mrf.mxu0
    %v1994 = vadd.f32 %v1945, %v1993
    %v1995 = vpop.f32.mrf.mxu0
    %v1996 = vadd.f32 %v1947, %v1995
    %1997 = vmatmul.bf16.gmra.mxu0 %v1670
    %v1998 = vpop.f32.mrf.mxu0
    %v1999 = vadd.f32 %v1950, %v1998
    %v2000 = vpop.f32.mrf.mxu0
    %v2001 = vadd.f32 %v1952, %v2000
    %2002 = vmatmul.bf16.gmra.mxu0 %v1673
    %v2003 = vpop.f32.mrf.mxu0
    %v2004 = vadd.f32 %v1955, %v2003
    %v2005 = vpop.f32.mrf.mxu0
    %v2006 = vadd.f32 %v1957, %v2005
    %2007 = vmatmul.bf16.gmra.mxu0 %v1676
    %v2008 = vpop.f32.mrf.mxu0
    %v2009 = vadd.f32 %v1960, %v2008
    %v2010 = vpop.f32.mrf.mxu0
    %v2011 = vadd.f32 %v1962, %v2010
    %2012 = vmatmul.bf16.gmra.mxu0 %v1679
    %v2013 = vpop.f32.mrf.mxu0
    %v2014 = vadd.f32 %v1965, %v2013
    %v2015 = vpop.f32.mrf.mxu0
    %v2016 = vadd.f32 %v1967, %v2015
    %2017 = vmatmul.bf16.gmra.mxu0 %v1682
    %v2018 = vpop.f32.mrf.mxu0
    %v2019 = vadd.f32 %v1970, %v2018
    %v2020 = vpop.f32.mrf.mxu0
    %v2021 = vadd.f32 %v1972, %v2020
    %2022 = vdwg.mxu0
    %v2071 = vunpack.c.l.b16 %v1563
    %v2072 = vunpack.c.l.b16 %v1564
    %v2073 = vunpack.c.l.b16 %v1565
    %v2074 = vunpack.c.l.b16 %v1566
    %v2075 = vunpack.c.l.b16 %v1567
    %v2076 = vunpack.c.l.b16 %v1568
    %v2077 = vunpack.c.l.b16 %v1569
    %v2078 = vunpack.c.l.b16 %v1570
    %v2079 = vunpack.c.l.b16 %v1571
    %v2080 = vunpack.c.l.b16 %v1572
    %v2081 = vunpack.c.l.b16 %v1573
    %v2082 = vunpack.c.l.b16 %v1574
    %v2083 = vunpack.c.l.b16 %v1575
    %v2084 = vunpack.c.l.b16 %v1576
    %v2085 = vunpack.c.l.b16 %v1577
    %v2086 = vunpack.c.l.b16 %v1578
    %v2087 = vunpack.c.l.b16 %v1579
    %v2088 = vunpack.c.l.b16 %v1580
    %v2089 = vunpack.c.l.b16 %v1581
    %v2090 = vunpack.c.l.b16 %v1582
    %v2091 = vunpack.c.l.b16 %v1583
    %v2092 = vunpack.c.l.b16 %v1584
    %v2093 = vunpack.c.l.b16 %v1585
    %v2094 = vunpack.c.l.b16 %v1586
    %v2095 = vunpack.c.l.b16 %v1587
    %v2096 = vunpack.c.l.b16 %v1588
    %v2097 = vunpack.c.l.b16 %v1589
    %v2098 = vunpack.c.l.b16 %v1590
    %v2099 = vunpack.c.l.b16 %v1591
    %v2100 = vunpack.c.l.b16 %v1592
    %v2101 = vunpack.c.l.b16 %v1593
    %v2102 = vunpack.c.l.b16 %v1594
    %v2103 = vunpack.c.l.b16 %v1595
    %v2104 = vunpack.c.l.b16 %v1596
    %v2105 = vunpack.c.l.b16 %v1597
    %v2106 = vunpack.c.l.b16 %v1598
    %v2107 = vunpack.c.l.b16 %v1599
    %v2108 = vunpack.c.l.b16 %v1600
    %v2109 = vunpack.c.l.b16 %v1601
    %v2110 = vunpack.c.l.b16 %v1602
    %v2111 = vunpack.c.l.b16 %v1603
    %v2112 = vunpack.c.l.b16 %v1604
    %v2113 = vunpack.c.l.b16 %v1605
    %v2114 = vunpack.c.l.b16 %v1606
    %v2115 = vunpack.c.l.b16 %v1607
    %v2116 = vunpack.c.l.b16 %v1608
    %v2117 = vunpack.c.l.b16 %v1609
    %v2118 = vunpack.c.l.b16 %v1610
    %v2119 = vpack.c.b16 %v2072, %v2071
    %v2120 = vpack.c.b16 %v2074, %v2073
    %v2121 = vpack.c.b16 %v2076, %v2075
    %v2122 = vpack.c.b16 %v2078, %v2077
    %v2123 = vpack.c.b16 %v2080, %v2079
    %v2124 = vpack.c.b16 %v2082, %v2081
    %v2125 = vpack.c.b16 %v2084, %v2083
    %v2126 = vpack.c.b16 %v2086, %v2085
    %v2127 = vpack.c.b16 %v2088, %v2087
    %v2128 = vpack.c.b16 %v2090, %v2089
    %v2129 = vpack.c.b16 %v2092, %v2091
    %v2130 = vpack.c.b16 %v2094, %v2093
    %v2131 = vpack.c.b16 %v2096, %v2095
    %v2132 = vpack.c.b16 %v2098, %v2097
    %v2133 = vpack.c.b16 %v2100, %v2099
    %v2134 = vpack.c.b16 %v2102, %v2101
    %v2135 = vpack.c.b16 %v2104, %v2103
    %v2136 = vpack.c.b16 %v2106, %v2105
    %v2137 = vpack.c.b16 %v2108, %v2107
    %v2138 = vpack.c.b16 %v2110, %v2109
    %v2139 = vpack.c.b16 %v2112, %v2111
    %v2140 = vpack.c.b16 %v2114, %v2113
    %v2141 = vpack.c.b16 %v2116, %v2115
    %v2142 = vpack.c.b16 %v2118, %v2117
    %2167 = vmatpush.bf16.msra.mxu0 %v2126
    %2168 = vmatpush.bf16.msra.mxu0 %v2125
    %2169 = vmatpush.bf16.msra.mxu0 %v2124
    %2170 = vmatpush.bf16.msra.mxu0 %v2123
    %2171 = vmatpush.bf16.msra.mxu0 %v2122
    %2172 = vmatpush.bf16.msra.mxu0 %v2121
    %2173 = vmatpush.bf16.msra.mxu0 %v2120
    %2174 = vmatpush.bf16.msra.mxu0 %v2119
    %2175 = vmatmul.bf16.gmra.mxu0 %v1539
    %v2176 = vpop.f32.mrf.mxu0
    %v2177 = vadd.f32 %v1984, %v2176
    %v2178 = vpop.f32.mrf.mxu0
    %v2179 = vadd.f32 %v1986, %v2178
    %2180 = vmatmul.bf16.gmra.mxu0 %v1542
    %v2181 = vpop.f32.mrf.mxu0
    %v2182 = vadd.f32 %v1989, %v2181
    %v2183 = vpop.f32.mrf.mxu0
    %v2184 = vadd.f32 %v1991, %v2183
    %2185 = vmatmul.bf16.gmra.mxu0 %v1545
    %v2186 = vpop.f32.mrf.mxu0
    %v2187 = vadd.f32 %v1994, %v2186
    %v2188 = vpop.f32.mrf.mxu0
    %v2189 = vadd.f32 %v1996, %v2188
    %2190 = vmatmul.bf16.gmra.mxu0 %v1548
    %v2191 = vpop.f32.mrf.mxu0
    %v2192 = vadd.f32 %v1999, %v2191
    %v2193 = vpop.f32.mrf.mxu0
    %v2194 = vadd.f32 %v2001, %v2193
    %2195 = vmatmul.bf16.gmra.mxu0 %v1551
    %v2196 = vpop.f32.mrf.mxu0
    %v2197 = vadd.f32 %v2004, %v2196
    %v2198 = vpop.f32.mrf.mxu0
    %v2199 = vadd.f32 %v2006, %v2198
    %2200 = vmatmul.bf16.gmra.mxu0 %v1554
    %v2201 = vpop.f32.mrf.mxu0
    %v2202 = vadd.f32 %v2009, %v2201
    %v2203 = vpop.f32.mrf.mxu0
    %v2204 = vadd.f32 %v2011, %v2203
    %2205 = vmatmul.bf16.gmra.mxu0 %v1557
    %v2206 = vpop.f32.mrf.mxu0
    %v2207 = vadd.f32 %v2014, %v2206
    %v2208 = vpop.f32.mrf.mxu0
    %v2209 = vadd.f32 %v2016, %v2208
    %2210 = vmatmul.bf16.gmra.mxu0 %v1560
    %v2211 = vpop.f32.mrf.mxu0
    %v2212 = vadd.f32 %v2019, %v2211
    %v2213 = vpop.f32.mrf.mxu0
    %v2214 = vadd.f32 %v2021, %v2213
    %2215 = vdwg.mxu0
    %2216 = vmatpush.bf16.msra.mxu0 %v2134
    %2217 = vmatpush.bf16.msra.mxu0 %v2133
    %2218 = vmatpush.bf16.msra.mxu0 %v2132
    %2219 = vmatpush.bf16.msra.mxu0 %v2131
    %2220 = vmatpush.bf16.msra.mxu0 %v2130
    %2221 = vmatpush.bf16.msra.mxu0 %v2129
    %2222 = vmatpush.bf16.msra.mxu0 %v2128
    %2223 = vmatpush.bf16.msra.mxu0 %v2127
    %2224 = vmatmul.bf16.gmra.mxu0 %v1540
    %v2225 = vpop.f32.mrf.mxu0
    %v2226 = vadd.f32 %v2177, %v2225
    %v2227 = vpop.f32.mrf.mxu0
    %v2228 = vadd.f32 %v2179, %v2227
    %2229 = vmatmul.bf16.gmra.mxu0 %v1543
    %v2230 = vpop.f32.mrf.mxu0
    %v2231 = vadd.f32 %v2182, %v2230
    %v2232 = vpop.f32.mrf.mxu0
    %v2233 = vadd.f32 %v2184, %v2232
    %2234 = vmatmul.bf16.gmra.mxu0 %v1546
    %v2235 = vpop.f32.mrf.mxu0
    %v2236 = vadd.f32 %v2187, %v2235
    %v2237 = vpop.f32.mrf.mxu0
    %v2238 = vadd.f32 %v2189, %v2237
    %2239 = vmatmul.bf16.gmra.mxu0 %v1549
    %v2240 = vpop.f32.mrf.mxu0
    %v2241 = vadd.f32 %v2192, %v2240
    %v2242 = vpop.f32.mrf.mxu0
    %v2243 = vadd.f32 %v2194, %v2242
    %2244 = vmatmul.bf16.gmra.mxu0 %v1552
    %v2245 = vpop.f32.mrf.mxu0
    %v2246 = vadd.f32 %v2197, %v2245
    %v2247 = vpop.f32.mrf.mxu0
    %v2248 = vadd.f32 %v2199, %v2247
    %2249 = vmatmul.bf16.gmra.mxu0 %v1555
    %v2250 = vpop.f32.mrf.mxu0
    %v2251 = vadd.f32 %v2202, %v2250
    %v2252 = vpop.f32.mrf.mxu0
    %v2253 = vadd.f32 %v2204, %v2252
    %2254 = vmatmul.bf16.gmra.mxu0 %v1558
    %v2255 = vpop.f32.mrf.mxu0
    %v2256 = vadd.f32 %v2207, %v2255
    %v2257 = vpop.f32.mrf.mxu0
    %v2258 = vadd.f32 %v2209, %v2257
    %2259 = vmatmul.bf16.gmra.mxu0 %v1561
    %v2260 = vpop.f32.mrf.mxu0
    %v2261 = vadd.f32 %v2212, %v2260
    %v2262 = vpop.f32.mrf.mxu0
    %v2263 = vadd.f32 %v2214, %v2262
    %2264 = vdwg.mxu0
    %2265 = vmatpush.bf16.msra.mxu0 %v2142
    %2266 = vmatpush.bf16.msra.mxu0 %v2141
    %2267 = vmatpush.bf16.msra.mxu0 %v2140
    %2268 = vmatpush.bf16.msra.mxu0 %v2139
    %2269 = vmatpush.bf16.msra.mxu0 %v2138
    %2270 = vmatpush.bf16.msra.mxu0 %v2137
    %2271 = vmatpush.bf16.msra.mxu0 %v2136
    %2272 = vmatpush.bf16.msra.mxu0 %v2135
    %2273 = vmatmul.bf16.gmra.mxu0 %v1541
    %v2274 = vpop.f32.mrf.mxu0
    %v2275 = vadd.f32 %v2226, %v2274
    %v2276 = vpop.f32.mrf.mxu0
    %v2277 = vadd.f32 %v2228, %v2276
    %2278 = vmatmul.bf16.gmra.mxu0 %v1544
    %v2279 = vpop.f32.mrf.mxu0
    %v2280 = vadd.f32 %v2231, %v2279
    %v2281 = vpop.f32.mrf.mxu0
    %v2282 = vadd.f32 %v2233, %v2281
    %2283 = vmatmul.bf16.gmra.mxu0 %v1547
    %v2284 = vpop.f32.mrf.mxu0
    %v2285 = vadd.f32 %v2236, %v2284
    %v2286 = vpop.f32.mrf.mxu0
    %v2287 = vadd.f32 %v2238, %v2286
    %2288 = vmatmul.bf16.gmra.mxu0 %v1550
    %v2289 = vpop.f32.mrf.mxu0
    %v2290 = vadd.f32 %v2241, %v2289
    %v2291 = vpop.f32.mrf.mxu0
    %v2292 = vadd.f32 %v2243, %v2291
    %2293 = vmatmul.bf16.gmra.mxu0 %v1553
    %v2294 = vpop.f32.mrf.mxu0
    %v2295 = vadd.f32 %v2246, %v2294
    %v2296 = vpop.f32.mrf.mxu0
    %v2297 = vadd.f32 %v2248, %v2296
    %2298 = vmatmul.bf16.gmra.mxu0 %v1556
    %v2299 = vpop.f32.mrf.mxu0
    %v2300 = vadd.f32 %v2251, %v2299
    %v2301 = vpop.f32.mrf.mxu0
    %v2302 = vadd.f32 %v2253, %v2301
    %2303 = vmatmul.bf16.gmra.mxu0 %v1559
    %v2304 = vpop.f32.mrf.mxu0
    %v2305 = vadd.f32 %v2256, %v2304
    %v2306 = vpop.f32.mrf.mxu0
    %v2307 = vadd.f32 %v2258, %v2306
    %2308 = vmatmul.bf16.gmra.mxu0 %v1562
    %v2309 = vpop.f32.mrf.mxu0
    %v2310 = vadd.f32 %v2261, %v2309
    %v2311 = vpop.f32.mrf.mxu0
    %v2312 = vadd.f32 %v2263, %v2311
    %2313 = vdwg.mxu0
    %v2314 = vld [vmem:[%s990 + $0x7] sm:$0xff]
    %v2315 = vld [vmem:[%s990 + $0x1f] sm:$0xff]
    %v2316 = vld [vmem:[%s990 + $0x37] sm:$0xff]
    %v2317 = vld [vmem:[%s990 + $0x4f] sm:$0xff]
    %v2318 = vld [vmem:[%s990 + $0x67] sm:$0xff]
    %v2319 = vld [vmem:[%s990 + $0x7f] sm:$0xff]
    %v2320 = vld [vmem:[%s990 + $0x97] sm:$0xff]
    %v2321 = vld [vmem:[%s990 + $0xaf] sm:$0xff]
    %v2322 = vld [vmem:[%s990 + $0xf7] sm:$0xff]
    %v2323 = vld [vmem:[%s990 + $0x10f] sm:$0xff]
    %v2324 = vld [vmem:[%s990 + $0x127] sm:$0xff]
    %v2325 = vld [vmem:[%s990 + $0x13f] sm:$0xff]
    %v2326 = vld [vmem:[%s990 + $0x157] sm:$0xff]
    %v2327 = vld [vmem:[%s990 + $0x16f] sm:$0xff]
    %v2328 = vld [vmem:[%s990 + $0x187] sm:$0xff]
    %v2329 = vld [vmem:[%s990 + $0x19f] sm:$0xff]
    %v2330 = vld [vmem:[%s990 + $0x8] sm:$0xff]
    %v2331 = vld [vmem:[%s990 + $0x20] sm:$0xff]
    %v2332 = vld [vmem:[%s990 + $0x38] sm:$0xff]
    %v2333 = vld [vmem:[%s990 + $0x50] sm:$0xff]
    %v2334 = vld [vmem:[%s990 + $0x68] sm:$0xff]
    %v2335 = vld [vmem:[%s990 + $0x80] sm:$0xff]
    %v2336 = vld [vmem:[%s990 + $0x98] sm:$0xff]
    %v2337 = vld [vmem:[%s990 + $0xb0] sm:$0xff]
    %v2338 = vld [vmem:[%s990 + $0xf8] sm:$0xff]
    %v2339 = vld [vmem:[%s990 + $0x110] sm:$0xff]
    %v2340 = vld [vmem:[%s990 + $0x128] sm:$0xff]
    %v2341 = vld [vmem:[%s990 + $0x140] sm:$0xff]
    %v2342 = vld [vmem:[%s990 + $0x158] sm:$0xff]
    %v2343 = vld [vmem:[%s990 + $0x170] sm:$0xff]
    %v2344 = vld [vmem:[%s990 + $0x188] sm:$0xff]
    %v2345 = vld [vmem:[%s990 + $0x1a0] sm:$0xff]
    %v2346 = vld [vmem:[%s990 + $0x9] sm:$0xff]
    %v2347 = vld [vmem:[%s990 + $0x21] sm:$0xff]
    %v2348 = vld [vmem:[%s990 + $0x39] sm:$0xff]
    %v2349 = vld [vmem:[%s990 + $0x51] sm:$0xff]
    %v2350 = vld [vmem:[%s990 + $0x69] sm:$0xff]
    %v2351 = vld [vmem:[%s990 + $0x81] sm:$0xff]
    %v2352 = vld [vmem:[%s990 + $0x99] sm:$0xff]
    %v2353 = vld [vmem:[%s990 + $0xb1] sm:$0xff]
    %v2354 = vld [vmem:[%s990 + $0xf9] sm:$0xff]
    %v2355 = vld [vmem:[%s990 + $0x111] sm:$0xff]
    %v2356 = vld [vmem:[%s990 + $0x129] sm:$0xff]
    %v2357 = vld [vmem:[%s990 + $0x141] sm:$0xff]
    %v2358 = vld [vmem:[%s990 + $0x159] sm:$0xff]
    %v2359 = vld [vmem:[%s990 + $0x171] sm:$0xff]
    %v2360 = vld [vmem:[%s990 + $0x189] sm:$0xff]
    %v2361 = vld [vmem:[%s990 + $0x1a1] sm:$0xff]
    %v2362 = vpack.c.bf16 %v2315, %v2314
    %v2363 = vpack.c.bf16 %v2331, %v2330
    %v2364 = vpack.c.bf16 %v2347, %v2346
    %v2365 = vpack.c.bf16 %v2317, %v2316
    %v2366 = vpack.c.bf16 %v2333, %v2332
    %v2367 = vpack.c.bf16 %v2349, %v2348
    %v2368 = vpack.c.bf16 %v2319, %v2318
    %v2369 = vpack.c.bf16 %v2335, %v2334
    %v2370 = vpack.c.bf16 %v2351, %v2350
    %v2371 = vpack.c.bf16 %v2321, %v2320
    %v2372 = vpack.c.bf16 %v2337, %v2336
    %v2373 = vpack.c.bf16 %v2353, %v2352
    %v2374 = vpack.c.bf16 %v2323, %v2322
    %v2375 = vpack.c.bf16 %v2339, %v2338
    %v2376 = vpack.c.bf16 %v2355, %v2354
    %v2377 = vpack.c.bf16 %v2325, %v2324
    %v2378 = vpack.c.bf16 %v2341, %v2340
    %v2379 = vpack.c.bf16 %v2357, %v2356
    %v2380 = vpack.c.bf16 %v2327, %v2326
    %v2381 = vpack.c.bf16 %v2343, %v2342
    %v2382 = vpack.c.bf16 %v2359, %v2358
    %v2383 = vpack.c.bf16 %v2329, %v2328
    %v2384 = vpack.c.bf16 %v2345, %v2344
    %v2385 = vpack.c.bf16 %v2361, %v2360
    %s2386 = scalar_lea.vmem [#allocation8], 384
    %v2387 = vld [vmem:[%s2386] sm:$0xf]
    %v2388 = vld [vmem:[%s2386 + $0x4] sm:$0xf]
    %v2389 = vld [vmem:[%s2386 + $0x8] sm:$0xf]
    %v2390 = vld [vmem:[%s2386 + $0xc] sm:$0xf]
    %v2391 = vld [vmem:[%s2386 + $0x10] sm:$0xf]
    %v2392 = vld [vmem:[%s2386 + $0x14] sm:$0xf]
    %v2393 = vld [vmem:[%s2386 + $0x18] sm:$0xf]
    %v2394 = vld [vmem:[%s2386 + $0x1c] sm:$0xf]
    %v2395 = vld [vmem:[%s2386 + $0x20] sm:$0xf]
    %v2396 = vld [vmem:[%s2386 + $0x24] sm:$0xf]
    %v2397 = vld [vmem:[%s2386 + $0x28] sm:$0xf]
    %v2398 = vld [vmem:[%s2386 + $0x2c] sm:$0xf]
    %v2399 = vld [vmem:[%s2386 + $0x30] sm:$0xf]
    %v2400 = vld [vmem:[%s2386 + $0x34] sm:$0xf]
    %v2401 = vld [vmem:[%s2386 + $0x38] sm:$0xf]
    %v2402 = vld [vmem:[%s2386 + $0x3c] sm:$0xf]
    %v2403 = vld [vmem:[%s2386 + $0x40] sm:$0xf]
    %v2404 = vld [vmem:[%s2386 + $0x44] sm:$0xf]
    %v2405 = vld [vmem:[%s2386 + $0x48] sm:$0xf]
    %v2406 = vld [vmem:[%s2386 + $0x4c] sm:$0xf]
    %v2407 = vld [vmem:[%s2386 + $0x50] sm:$0xf]
    %v2408 = vld [vmem:[%s2386 + $0x54] sm:$0xf]
    %v2409 = vld [vmem:[%s2386 + $0x58] sm:$0xf]
    %v2410 = vld [vmem:[%s2386 + $0x5c] sm:$0xf]
    %v2411 = vld [vmem:[%s2386 + $0x60] sm:$0xf]
    %v2412 = vld [vmem:[%s2386 + $0x64] sm:$0xf]
    %v2413 = vld [vmem:[%s2386 + $0x68] sm:$0xf]
    %v2414 = vld [vmem:[%s2386 + $0x6c] sm:$0xf]
    %v2415 = vld [vmem:[%s2386 + $0x70] sm:$0xf]
    %v2416 = vld [vmem:[%s2386 + $0x74] sm:$0xf]
    %v2417 = vld [vmem:[%s2386 + $0x78] sm:$0xf]
    %v2418 = vld [vmem:[%s2386 + $0x7c] sm:$0xf]
    %v2419 = vld [vmem:[%s2386 + $0x80] sm:$0xf]
    %v2420 = vld [vmem:[%s2386 + $0x84] sm:$0xf]
    %v2421 = vld [vmem:[%s2386 + $0x88] sm:$0xf]
    %v2422 = vld [vmem:[%s2386 + $0x8c] sm:$0xf]
    %v2423 = vld [vmem:[%s2386 + $0x90] sm:$0xf]
    %v2424 = vld [vmem:[%s2386 + $0x94] sm:$0xf]
    %v2425 = vld [vmem:[%s2386 + $0x98] sm:$0xf]
    %v2426 = vld [vmem:[%s2386 + $0x9c] sm:$0xf]
    %v2427 = vld [vmem:[%s2386 + $0xa0] sm:$0xf]
    %v2428 = vld [vmem:[%s2386 + $0xa4] sm:$0xf]
    %v2429 = vld [vmem:[%s2386 + $0xa8] sm:$0xf]
    %v2430 = vld [vmem:[%s2386 + $0xac] sm:$0xf]
    %v2431 = vld [vmem:[%s2386 + $0xb0] sm:$0xf]
    %v2432 = vld [vmem:[%s2386 + $0xb4] sm:$0xf]
    %v2433 = vld [vmem:[%s2386 + $0xb8] sm:$0xf]
    %v2434 = vld [vmem:[%s2386 + $0xbc] sm:$0xf]
    %v2483 = vunpack.c.l.b16 %v2387
    %v2484 = vunpack.c.l.b16 %v2388
    %v2485 = vunpack.c.l.b16 %v2389
    %v2486 = vunpack.c.l.b16 %v2390
    %v2487 = vunpack.c.l.b16 %v2391
    %v2488 = vunpack.c.l.b16 %v2392
    %v2489 = vunpack.c.l.b16 %v2393
    %v2490 = vunpack.c.l.b16 %v2394
    %v2491 = vunpack.c.l.b16 %v2395
    %v2492 = vunpack.c.l.b16 %v2396
    %v2493 = vunpack.c.l.b16 %v2397
    %v2494 = vunpack.c.l.b16 %v2398
    %v2495 = vunpack.c.l.b16 %v2399
    %v2496 = vunpack.c.l.b16 %v2400
    %v2497 = vunpack.c.l.b16 %v2401
    %v2498 = vunpack.c.l.b16 %v2402
    %v2499 = vunpack.c.l.b16 %v2403
    %v2500 = vunpack.c.l.b16 %v2404
    %v2501 = vunpack.c.l.b16 %v2405
    %v2502 = vunpack.c.l.b16 %v2406
    %v2503 = vunpack.c.l.b16 %v2407
    %v2504 = vunpack.c.l.b16 %v2408
    %v2505 = vunpack.c.l.b16 %v2409
    %v2506 = vunpack.c.l.b16 %v2410
    %v2507 = vunpack.c.l.b16 %v2411
    %v2508 = vunpack.c.l.b16 %v2412
    %v2509 = vunpack.c.l.b16 %v2413
    %v2510 = vunpack.c.l.b16 %v2414
    %v2511 = vunpack.c.l.b16 %v2415
    %v2512 = vunpack.c.l.b16 %v2416
    %v2513 = vunpack.c.l.b16 %v2417
    %v2514 = vunpack.c.l.b16 %v2418
    %v2515 = vunpack.c.l.b16 %v2419
    %v2516 = vunpack.c.l.b16 %v2420
    %v2517 = vunpack.c.l.b16 %v2421
    %v2518 = vunpack.c.l.b16 %v2422
    %v2519 = vunpack.c.l.b16 %v2423
    %v2520 = vunpack.c.l.b16 %v2424
    %v2521 = vunpack.c.l.b16 %v2425
    %v2522 = vunpack.c.l.b16 %v2426
    %v2523 = vunpack.c.l.b16 %v2427
    %v2524 = vunpack.c.l.b16 %v2428
    %v2525 = vunpack.c.l.b16 %v2429
    %v2526 = vunpack.c.l.b16 %v2430
    %v2527 = vunpack.c.l.b16 %v2431
    %v2528 = vunpack.c.l.b16 %v2432
    %v2529 = vunpack.c.l.b16 %v2433
    %v2530 = vunpack.c.l.b16 %v2434
    %v2531 = vpack.c.b16 %v2484, %v2483
    %v2532 = vpack.c.b16 %v2486, %v2485
    %v2533 = vpack.c.b16 %v2488, %v2487
    %v2534 = vpack.c.b16 %v2490, %v2489
    %v2535 = vpack.c.b16 %v2492, %v2491
    %v2536 = vpack.c.b16 %v2494, %v2493
    %v2537 = vpack.c.b16 %v2496, %v2495
    %v2538 = vpack.c.b16 %v2498, %v2497
    %v2539 = vpack.c.b16 %v2500, %v2499
    %v2540 = vpack.c.b16 %v2502, %v2501
    %v2541 = vpack.c.b16 %v2504, %v2503
    %v2542 = vpack.c.b16 %v2506, %v2505
    %v2543 = vpack.c.b16 %v2508, %v2507
    %v2544 = vpack.c.b16 %v2510, %v2509
    %v2545 = vpack.c.b16 %v2512, %v2511
    %v2546 = vpack.c.b16 %v2514, %v2513
    %v2547 = vpack.c.b16 %v2516, %v2515
    %v2548 = vpack.c.b16 %v2518, %v2517
    %v2549 = vpack.c.b16 %v2520, %v2519
    %v2550 = vpack.c.b16 %v2522, %v2521
    %v2551 = vpack.c.b16 %v2524, %v2523
    %v2552 = vpack.c.b16 %v2526, %v2525
    %v2553 = vpack.c.b16 %v2528, %v2527
    %v2554 = vpack.c.b16 %v2530, %v2529
    %2579 = vmatpush.bf16.msra.mxu0 %v2538
    %2580 = vmatpush.bf16.msra.mxu0 %v2537
    %2581 = vmatpush.bf16.msra.mxu0 %v2536
    %2582 = vmatpush.bf16.msra.mxu0 %v2535
    %2583 = vmatpush.bf16.msra.mxu0 %v2534
    %2584 = vmatpush.bf16.msra.mxu0 %v2533
    %2585 = vmatpush.bf16.msra.mxu0 %v2532
    %2586 = vmatpush.bf16.msra.mxu0 %v2531
    %2587 = vmatmul.bf16.gmra.mxu0 %v2362
    %v2588 = vpop.f32.mrf.mxu0
    %v2589 = vadd.f32 0.0, %v2588
    %v2590 = vpop.f32.mrf.mxu0
    %v2591 = vadd.f32 0.0, %v2590
    %2592 = vmatmul.bf16.gmra.mxu0 %v2365
    %v2593 = vpop.f32.mrf.mxu0
    %v2594 = vadd.f32 0.0, %v2593
    %v2595 = vpop.f32.mrf.mxu0
    %v2596 = vadd.f32 0.0, %v2595
    %2597 = vmatmul.bf16.gmra.mxu0 %v2368
    %v2598 = vpop.f32.mrf.mxu0
    %v2599 = vadd.f32 0.0, %v2598
    %v2600 = vpop.f32.mrf.mxu0
    %v2601 = vadd.f32 0.0, %v2600
    %2602 = vmatmul.bf16.gmra.mxu0 %v2371
    %v2603 = vpop.f32.mrf.mxu0
    %v2604 = vadd.f32 0.0, %v2603
    %v2605 = vpop.f32.mrf.mxu0
    %v2606 = vadd.f32 0.0, %v2605
    %2607 = vmatmul.bf16.gmra.mxu0 %v2374
    %v2608 = vpop.f32.mrf.mxu0
    %v2609 = vadd.f32 0.0, %v2608
    %v2610 = vpop.f32.mrf.mxu0
    %v2611 = vadd.f32 0.0, %v2610
    %2612 = vmatmul.bf16.gmra.mxu0 %v2377
    %v2613 = vpop.f32.mrf.mxu0
    %v2614 = vadd.f32 0.0, %v2613
    %v2615 = vpop.f32.mrf.mxu0
    %v2616 = vadd.f32 0.0, %v2615
    %2617 = vmatmul.bf16.gmra.mxu0 %v2380
    %v2618 = vpop.f32.mrf.mxu0
    %v2619 = vadd.f32 0.0, %v2618
    %v2620 = vpop.f32.mrf.mxu0
    %v2621 = vadd.f32 0.0, %v2620
    %2622 = vmatmul.bf16.gmra.mxu0 %v2383
    %v2623 = vpop.f32.mrf.mxu0
    %v2624 = vadd.f32 0.0, %v2623
    %v2625 = vpop.f32.mrf.mxu0
    %v2626 = vadd.f32 0.0, %v2625
    %2627 = vdwg.mxu0
    %2628 = vmatpush.bf16.msra.mxu0 %v2546
    %2629 = vmatpush.bf16.msra.mxu0 %v2545
    %2630 = vmatpush.bf16.msra.mxu0 %v2544
    %2631 = vmatpush.bf16.msra.mxu0 %v2543
    %2632 = vmatpush.bf16.msra.mxu0 %v2542
    %2633 = vmatpush.bf16.msra.mxu0 %v2541
    %2634 = vmatpush.bf16.msra.mxu0 %v2540
    %2635 = vmatpush.bf16.msra.mxu0 %v2539
    %2636 = vmatmul.bf16.gmra.mxu0 %v2363
    %v2637 = vpop.f32.mrf.mxu0
    %v2638 = vadd.f32 %v2589, %v2637
    %v2639 = vpop.f32.mrf.mxu0
    %v2640 = vadd.f32 %v2591, %v2639
    %2641 = vmatmul.bf16.gmra.mxu0 %v2366
    %v2642 = vpop.f32.mrf.mxu0
    %v2643 = vadd.f32 %v2594, %v2642
    %v2644 = vpop.f32.mrf.mxu0
    %v2645 = vadd.f32 %v2596, %v2644
    %2646 = vmatmul.bf16.gmra.mxu0 %v2369
    %v2647 = vpop.f32.mrf.mxu0
    %v2648 = vadd.f32 %v2599, %v2647
    %v2649 = vpop.f32.mrf.mxu0
    %v2650 = vadd.f32 %v2601, %v2649
    %2651 = vmatmul.bf16.gmra.mxu0 %v2372
    %v2652 = vpop.f32.mrf.mxu0
    %v2653 = vadd.f32 %v2604, %v2652
    %v2654 = vpop.f32.mrf.mxu0
    %v2655 = vadd.f32 %v2606, %v2654
    %2656 = vmatmul.bf16.gmra.mxu0 %v2375
    %v2657 = vpop.f32.mrf.mxu0
    %v2658 = vadd.f32 %v2609, %v2657
    %v2659 = vpop.f32.mrf.mxu0
    %v2660 = vadd.f32 %v2611, %v2659
    %2661 = vmatmul.bf16.gmra.mxu0 %v2378
    %v2662 = vpop.f32.mrf.mxu0
    %v2663 = vadd.f32 %v2614, %v2662
    %v2664 = vpop.f32.mrf.mxu0
    %v2665 = vadd.f32 %v2616, %v2664
    %2666 = vmatmul.bf16.gmra.mxu0 %v2381
    %v2667 = vpop.f32.mrf.mxu0
    %v2668 = vadd.f32 %v2619, %v2667
    %v2669 = vpop.f32.mrf.mxu0
    %v2670 = vadd.f32 %v2621, %v2669
    %2671 = vmatmul.bf16.gmra.mxu0 %v2384
    %v2672 = vpop.f32.mrf.mxu0
    %v2673 = vadd.f32 %v2624, %v2672
    %v2674 = vpop.f32.mrf.mxu0
    %v2675 = vadd.f32 %v2626, %v2674
    %2676 = vdwg.mxu0
    %2677 = vmatpush.bf16.msra.mxu0 %v2554
    %2678 = vmatpush.bf16.msra.mxu0 %v2553
    %2679 = vmatpush.bf16.msra.mxu0 %v2552
    %2680 = vmatpush.bf16.msra.mxu0 %v2551
    %2681 = vmatpush.bf16.msra.mxu0 %v2550
    %2682 = vmatpush.bf16.msra.mxu0 %v2549
    %2683 = vmatpush.bf16.msra.mxu0 %v2548
    %2684 = vmatpush.bf16.msra.mxu0 %v2547
    %2685 = vmatmul.bf16.gmra.mxu0 %v2364
    %v2686 = vpop.f32.mrf.mxu0
    %v2687 = vadd.f32 %v2638, %v2686
    %v2688 = vpop.f32.mrf.mxu0
    %v2689 = vadd.f32 %v2640, %v2688
    %2690 = vmatmul.bf16.gmra.mxu0 %v2367
    %v2691 = vpop.f32.mrf.mxu0
    %v2692 = vadd.f32 %v2643, %v2691
    %v2693 = vpop.f32.mrf.mxu0
    %v2694 = vadd.f32 %v2645, %v2693
    %2695 = vmatmul.bf16.gmra.mxu0 %v2370
    %v2696 = vpop.f32.mrf.mxu0
    %v2697 = vadd.f32 %v2648, %v2696
    %v2698 = vpop.f32.mrf.mxu0
    %v2699 = vadd.f32 %v2650, %v2698
    %2700 = vmatmul.bf16.gmra.mxu0 %v2373
    %v2701 = vpop.f32.mrf.mxu0
    %v2702 = vadd.f32 %v2653, %v2701
    %v2703 = vpop.f32.mrf.mxu0
    %v2704 = vadd.f32 %v2655, %v2703
    %2705 = vmatmul.bf16.gmra.mxu0 %v2376
    %v2706 = vpop.f32.mrf.mxu0
    %v2707 = vadd.f32 %v2658, %v2706
    %v2708 = vpop.f32.mrf.mxu0
    %v2709 = vadd.f32 %v2660, %v2708
    %2710 = vmatmul.bf16.gmra.mxu0 %v2379
    %v2711 = vpop.f32.mrf.mxu0
    %v2712 = vadd.f32 %v2663, %v2711
    %v2713 = vpop.f32.mrf.mxu0
    %v2714 = vadd.f32 %v2665, %v2713
    %2715 = vmatmul.bf16.gmra.mxu0 %v2382
    %v2716 = vpop.f32.mrf.mxu0
    %v2717 = vadd.f32 %v2668, %v2716
    %v2718 = vpop.f32.mrf.mxu0
    %v2719 = vadd.f32 %v2670, %v2718
    %2720 = vmatmul.bf16.gmra.mxu0 %v2385
    %v2721 = vpop.f32.mrf.mxu0
    %v2722 = vadd.f32 %v2673, %v2721
    %v2723 = vpop.f32.mrf.mxu0
    %v2724 = vadd.f32 %v2675, %v2723
    %2725 = vdwg.mxu0
    %v2726 = vadd.f32 %v2275, %v2687
    %v2727 = vadd.f32 %v2277, %v2689
    %v2728 = vadd.f32 %v2280, %v2692
    %v2729 = vadd.f32 %v2282, %v2694
    %v2730 = vadd.f32 %v2285, %v2697
    %v2731 = vadd.f32 %v2287, %v2699
    %v2732 = vadd.f32 %v2290, %v2702
    %v2733 = vadd.f32 %v2292, %v2704
    %v2734 = vadd.f32 %v2295, %v2707
    %v2735 = vadd.f32 %v2297, %v2709
    %v2736 = vadd.f32 %v2300, %v2712
    %v2737 = vadd.f32 %v2302, %v2714
    %v2738 = vadd.f32 %v2305, %v2717
    %v2739 = vadd.f32 %v2307, %v2719
    %v2740 = vadd.f32 %v2310, %v2722
    %v2741 = vadd.f32 %v2312, %v2724
    %v2742 = vld [vmem:[%s5] sm:$0x1]
    %v2744 = vperm.slane %v2742, 0
    %v2746 = vmul.f32 %v2726, %v2744
    %v2747 = vmul.f32 %v2727, %v2744
    %v2748 = vmul.f32 %v2728, %v2744
    %v2749 = vmul.f32 %v2729, %v2744
    %v2750 = vmul.f32 %v2730, %v2744
    %v2751 = vmul.f32 %v2731, %v2744
    %v2752 = vmul.f32 %v2732, %v2744
    %v2753 = vmul.f32 %v2733, %v2744
    %v2754 = vmul.f32 %v2734, %v2744
    %v2755 = vmul.f32 %v2735, %v2744
    %v2756 = vmul.f32 %v2736, %v2744
    %v2757 = vmul.f32 %v2737, %v2744
    %v2758 = vmul.f32 %v2738, %v2744
    %v2759 = vmul.f32 %v2739, %v2744
    %v2760 = vmul.f32 %v2740, %v2744
    %v2761 = vmul.f32 %v2741, %v2744
    %v2762 = vld [vmem:[%s6] sm:$0x1]
    %v2764 = vperm.slane %v2762, 0
    %v2766 = vadd.f32 %v2746, %v2764
    %v2767 = vadd.f32 %v2747, %v2764
    %v2768 = vadd.f32 %v2748, %v2764
    %v2769 = vadd.f32 %v2749, %v2764
    %v2770 = vadd.f32 %v2750, %v2764
    %v2771 = vadd.f32 %v2751, %v2764
    %v2772 = vadd.f32 %v2752, %v2764
    %v2773 = vadd.f32 %v2753, %v2764
    %v2774 = vadd.f32 %v2754, %v2764
    %v2775 = vadd.f32 %v2755, %v2764
    %v2776 = vadd.f32 %v2756, %v2764
    %v2777 = vadd.f32 %v2757, %v2764
    %v2778 = vadd.f32 %v2758, %v2764
    %v2779 = vadd.f32 %v2759, %v2764
    %v2780 = vadd.f32 %v2760, %v2764
    %v2781 = vadd.f32 %v2761, %v2764
    %v2782 = vld [vmem:[#allocation3] sm:$0xff]
    %v2783 = vld [vmem:[#allocation3 + $0x8] sm:$0xff]
    %v2784 = vld [vmem:[#allocation3 + $0x10] sm:$0xff]
    %v2785 = vld [vmem:[#allocation3 + $0x18] sm:$0xff]
    %v2786 = vld [vmem:[#allocation3 + $0x20] sm:$0xff]
    %v2787 = vld [vmem:[#allocation3 + $0x28] sm:$0xff]
    %v2788 = vld [vmem:[#allocation3 + $0x30] sm:$0xff]
    %v2789 = vld [vmem:[#allocation3 + $0x38] sm:$0xff]
    %v2790 = vld [vmem:[#allocation3 + $0x40] sm:$0xff]
    %v2791 = vld [vmem:[#allocation3 + $0x48] sm:$0xff]
    %v2792 = vld [vmem:[#allocation3 + $0x50] sm:$0xff]
    %v2793 = vld [vmem:[#allocation3 + $0x58] sm:$0xff]
    %v2794 = vld [vmem:[#allocation3 + $0x60] sm:$0xff]
    %v2795 = vld [vmem:[#allocation3 + $0x68] sm:$0xff]
    %v2796 = vld [vmem:[#allocation3 + $0x70] sm:$0xff]
    %v2797 = vld [vmem:[#allocation3 + $0x78] sm:$0xff]
    %v2798 = vadd.f32 %v2766, %v2782
    %v2799 = vadd.f32 %v2767, %v2783
    %v2800 = vadd.f32 %v2768, %v2784
    %v2801 = vadd.f32 %v2769, %v2785
    %v2802 = vadd.f32 %v2770, %v2786
    %v2803 = vadd.f32 %v2771, %v2787
    %v2804 = vadd.f32 %v2772, %v2788
    %v2805 = vadd.f32 %v2773, %v2789
    %v2806 = vadd.f32 %v2774, %v2790
    %v2807 = vadd.f32 %v2775, %v2791
    %v2808 = vadd.f32 %v2776, %v2792
    %v2809 = vadd.f32 %v2777, %v2793
    %v2810 = vadd.f32 %v2778, %v2794
    %v2811 = vadd.f32 %v2779, %v2795
    %v2812 = vadd.f32 %v2780, %v2796
    %v2813 = vadd.f32 %v2781, %v2797
    %v2814 = vmax.f32 %v2798, 0.0
    %v2815 = vmax.f32 %v2799, 0.0
    %v2816 = vmax.f32 %v2800, 0.0
    %v2817 = vmax.f32 %v2801, 0.0
    %v2818 = vmax.f32 %v2802, 0.0
    %v2819 = vmax.f32 %v2803, 0.0
    %v2820 = vmax.f32 %v2804, 0.0
    %v2821 = vmax.f32 %v2805, 0.0
    %v2822 = vmax.f32 %v2806, 0.0
    %v2823 = vmax.f32 %v2807, 0.0
    %v2824 = vmax.f32 %v2808, 0.0
    %v2825 = vmax.f32 %v2809, 0.0
    %v2826 = vmax.f32 %v2810, 0.0
    %v2827 = vmax.f32 %v2811, 0.0
    %v2828 = vmax.f32 %v2812, 0.0
    %v2829 = vmax.f32 %v2813, 0.0
    %2830 = vst [vmem:[#allocation9] sm:$0xff] %v2814
    %2831 = vst [vmem:[#allocation9 + $0x8] sm:$0xff] %v2815
    %2832 = vst [vmem:[#allocation9 + $0x10] sm:$0xff] %v2816
    %2833 = vst [vmem:[#allocation9 + $0x18] sm:$0xff] %v2817
    %2834 = vst [vmem:[#allocation9 + $0x20] sm:$0xff] %v2818
    %2835 = vst [vmem:[#allocation9 + $0x28] sm:$0xff] %v2819
    %2836 = vst [vmem:[#allocation9 + $0x30] sm:$0xff] %v2820
    %2837 = vst [vmem:[#allocation9 + $0x38] sm:$0xff] %v2821
    %2838 = vst [vmem:[#allocation9 + $0x40] sm:$0xff] %v2822
    %2839 = vst [vmem:[#allocation9 + $0x48] sm:$0xff] %v2823
    %2840 = vst [vmem:[#allocation9 + $0x50] sm:$0xff] %v2824
    %2841 = vst [vmem:[#allocation9 + $0x58] sm:$0xff] %v2825
    %2842 = vst [vmem:[#allocation9 + $0x60] sm:$0xff] %v2826
    %2843 = vst [vmem:[#allocation9 + $0x68] sm:$0xff] %v2827
    %2844 = vst [vmem:[#allocation9 + $0x70] sm:$0xff] %v2828
    %2845 = vst [vmem:[#allocation9 + $0x78] sm:$0xff] %v2829
    // Predicated region
    $region42: #{resblock_forward.1} parent=1 // pred_check
      _
    $region43: #{resblock_forward.1} parent=1 // pred_check_branch
      %2847 = sbr.rel (0) target = $region45
    $region44: #{resblock_forward.1} parent=1 // pred_region
      %2849 = vsyncadd [#allocation5], 0
      %s2850 = sshll.u32 [#allocation9], 4
      %s2851 = int_to_ptr.vmem [resolvable:$true] %s2850
      %s2852 = sshll.u32 %s7, 4
      %s2853 = int_to_ptr.hbm [resolvable:$true] %s2852
      %2858 = dma.vmem_to_hbm [thread:$0]  %s2851, 2048, %s2853, [#allocation5], 128, 128, 8
    $region45: #{resblock_forward.1} parent=1 // pred_fallthru
      _
    // Predicated region
    $region46: #{resblock_forward.1} parent=1 // pred_check
      _
    $region47: #{resblock_forward.1} parent=1 // pred_check_branch
      %2860 = sbr.rel (0) target = $region49
    $region48: #{resblock_forward.1} parent=1 // pred_region
      %2862 = dma.done [#allocation5], 2048
    $region49: #{resblock_forward.1} parent=1 // pred_fallthru
      _
    %2863 = vsyncpa [#allocation4], 1
    %2864 = vsyncpa [#allocation7], 1
    %2865 = vsyncpa [#allocation5], 1

</llo_original>
